<compile_context>
chip_gen: v7x
topology: tpu7x:2x2x1
jax: 0.10.0
libtpu: 0.0.40
codegen_flags: <defaults>
</compile_context>

<pallas_src>
import jax
import jax.numpy as jnp
from jax import lax
from jax.experimental import pallas as pl
from jax.experimental.pallas import tpu as pltpu

EMBED_LEN = 50
HIDDEN_DIM = 50
N_CLASSES = 4        # ['World', 'Sports', 'Business', 'Sci/Tech']
VOCAB_SIZE = 100     # small synthetic vocab
N_LAYERS = 1

LANE = 128           # TPU lane width
SUBLANE = 8          # TPU sublane width


def _round_up(x, m):
    return (x + m - 1) // m * m


def rnn_classifier_kernel(tok_ref, h0_ref, table_ref, wih_ref, whh_ref, b_ref,
                          wout_ref, bout_ref, out_ref, pre_ref):
    """Embedding gather + RNN recurrence + final linear layer for one batch block.

    tok_ref  : (1, T, B_blk) int32  time-major token ids for this batch block
    h0_ref   : (B_blk, H_pad)       initial hidden state
    table_ref: (V_pad, E_pad)       zero-padded embedding table (VMEM resident)
    wih_ref  : (E_pad, H_pad)       input->hidden weight (pre-transposed, zero-padded)
    whh_ref  : (H_pad, H_pad)       hidden->hidden weight (pre-transposed, zero-padded)
    b_ref    : (1, H_pad)           combined bias (b_ih + b_hh), zero-padded
    wout_ref : (H_pad, C_pad)       classifier weight (pre-transposed, zero-padded)
    bout_ref : (1, C_pad)           classifier bias, zero-padded
    out_ref  : (B_blk, C_pad)       lane-dense logits slab
    pre_ref  : (T, B_blk, H_pad)    VMEM scratch for the hoisted input projection
    """
    _, T, Bb = tok_ref.shape
    V, _ = table_ref.shape
    H = whh_ref.shape[0]

    # --- in-kernel embedding gather via one-hot MXU matmul (exact in f32) ---
    tok = tok_ref[0]                                            # (T, Bb) int32, time-major
    iota_v = lax.broadcasted_iota(jnp.int32, (T, Bb, V), 2)
    onehot = (tok[:, :, None] == iota_v).astype(jnp.float32)    # (T, Bb, V)
    onehot = onehot.reshape(T * Bb, V)                          # leading-dim collapse (layout-free)
    emb = jnp.dot(onehot, table_ref[...],
                  preferred_element_type=jnp.float32)           # (T*Bb, E_pad)

    # --- hoisted input projection + combined bias: one big MXU matmul ---
    pre = jnp.dot(emb, wih_ref[...],
                  preferred_element_type=jnp.float32) + b_ref[...]
    pre_ref[...] = pre.reshape(T, Bb, H)                        # single contiguous store

    whh = whh_ref[...]                                          # keep RHS resident across steps
    # TODO(synk): keep W_hh stationary in the MXU across steps with
    # pltpu.matmul_push_rhs / matmul_acc_lhs / matmul_pop.

    # Two independent recurrence chains (when the block is big enough) so the scheduler
    # can overlap one chain's MXU matmul with the other's tanh (EUP).
    n_chains = 2 if (Bb >= 16 and Bb % 16 == 0) else 1
    rows = Bb // n_chains

    def step(t, hs):
        x_t = pre_ref[t]                                        # (Bb, H), dynamic leading index
        return tuple(
            jnp.tanh(x_t[c * rows:(c + 1) * rows, :]
                     + jnp.dot(hs[c], whh, preferred_element_type=jnp.float32))
            for c in range(n_chains))

    h0 = h0_ref[...]
    hs0 = tuple(h0[c * rows:(c + 1) * rows, :] for c in range(n_chains))
    unroll = True if T <= 8 else 8                              # bounded unroll for long T
    hs = lax.fori_loop(0, T, step, hs0, unroll=unroll)
    h_last = jnp.concatenate(hs, axis=0) if n_chains > 1 else hs[0]   # == output[:, -1]

    # --- classifier head: lane-dense (B_blk, 128) logits slab ---
    out_ref[...] = (jnp.dot(h_last, wout_ref[...],
                            preferred_element_type=jnp.float32) + bout_ref[...])


def rnn_classifier_forward(tokens, params, h0):
    """tokens: (B, T) int32 token ids, h0: (B, HIDDEN_DIM). Returns (B, N_CLASSES) f32."""
    emb_table, w_ih, w_hh, b_ih, b_hh, w_lin, b_lin = params
    B, T = tokens.shape
    V = emb_table.shape[0]

    V_pad = _round_up(V, LANE)            # 128
    E_pad = _round_up(EMBED_LEN, LANE)    # 128
    H_pad = _round_up(HIDDEN_DIM, LANE)   # 128
    C_pad = _round_up(N_CLASSES, LANE)    # 128

    # Batch blocking: prefer >= 2 blocks so ("parallel",) can shard across v7x's two
    # TensorCores and pipeline the (tiny) token DMA; cap at 256 rows to fill v6e/v7x MXUs.
    B_pad0 = _round_up(B, SUBLANE)
    if B_pad0 >= 2 * SUBLANE:
        B_blk = min(256, _round_up((B_pad0 + 1) // 2, SUBLANE))
    else:
        B_blk = B_pad0
    B_pad = _round_up(B_pad0, B_blk)
    n_blk = B_pad // B_blk

    # --- glue (plain JAX): only cheap int32 token reshuffling + weight zero-padding ---
    tokens_p = jnp.pad(tokens, ((0, B_pad - B), (0, 0)))                    # (B_pad, T)
    # per-block, time-major token ids: (n_blk, T, B_blk) — ~128x fewer HBM bytes than
    # materializing the f32 embeddings in the wrapper.
    tok_blocks = tokens_p.reshape(n_blk, B_blk, T).transpose(0, 2, 1)

    table_p = jnp.pad(emb_table, ((0, V_pad - V), (0, E_pad - EMBED_LEN)))  # (V_pad, E_pad)
    wih_t = jnp.pad(w_ih.T, ((0, E_pad - EMBED_LEN), (0, H_pad - HIDDEN_DIM)))
    whh_t = jnp.pad(w_hh.T, ((0, H_pad - HIDDEN_DIM), (0, H_pad - HIDDEN_DIM)))
    b = jnp.pad((b_ih + b_hh).reshape(1, HIDDEN_DIM), ((0, 0), (0, H_pad - HIDDEN_DIM)))
    wout_t = jnp.pad(w_lin.T, ((0, H_pad - HIDDEN_DIM), (0, C_pad - N_CLASSES)))
    bout = jnp.pad(b_lin.reshape(1, N_CLASSES), ((0, 0), (0, C_pad - N_CLASSES)))
    h0_p = jnp.pad(h0, ((0, B_pad - B), (0, H_pad - HIDDEN_DIM)))           # (B_pad, H_pad)

    logits_pad = pl.pallas_call(
        rnn_classifier_kernel,
        out_shape=jax.ShapeDtypeStruct((B_pad, C_pad), jnp.float32),
        grid_spec=pltpu.PrefetchScalarGridSpec(
            num_scalar_prefetch=0,
            grid=(n_blk,),
            in_specs=[
                pl.BlockSpec((1, T, B_blk), lambda i: (i, 0, 0)),   # int32 tokens per block
                pl.BlockSpec((B_blk, H_pad), lambda i: (i, 0)),     # h0 per block
                pl.BlockSpec((V_pad, E_pad), lambda i: (0, 0)),     # embedding table resident
                pl.BlockSpec((E_pad, H_pad), lambda i: (0, 0)),     # weights resident
                pl.BlockSpec((H_pad, H_pad), lambda i: (0, 0)),
                pl.BlockSpec((1, H_pad), lambda i: (0, 0)),
                pl.BlockSpec((H_pad, C_pad), lambda i: (0, 0)),
                pl.BlockSpec((1, C_pad), lambda i: (0, 0)),
            ],
            out_specs=pl.BlockSpec((B_blk, C_pad), lambda i: (i, 0)),
            scratch_shapes=[pltpu.VMEM((T, B_blk, H_pad), jnp.float32)],
        ),
        compiler_params=pltpu.CompilerParams(
            dimension_semantics=("parallel",),   # shard batch blocks across TCs (v7x)
            vmem_limit_bytes=32 * 1024 * 1024,   # re-derive when scaling T/B_blk (v7x: 64 MiB phys)
        ),
    )(tok_blocks, h0_p, table_p, wih_t, whh_t, b, wout_t, bout)

    return logits_pad[:B, :N_CLASSES]


def rnn_classifier_reference(tokens, params, h0):
    """Pure-JAX reference with PyTorch semantics (HIGHEST matmul precision)."""
    emb_table, w_ih, w_hh, b_ih, b_hh, w_lin, b_lin = params
    hp = lax.Precision.HIGHEST
    emb = jnp.take(emb_table, tokens, axis=0)              # (B, T, E)

    def step(h, x_t):
        h = jnp.tanh(jnp.dot(x_t, w_ih.T, precision=hp) + b_ih
                     + jnp.dot(h, w_hh.T, precision=hp) + b_hh)
        return h, None

    h_last, _ = lax.scan(step, h0, jnp.transpose(emb, (1, 0, 2)))
    return jnp.dot(h_last, w_lin.T, precision=hp) + b_lin


def init_params(key):
    """Deterministic parameter init matching the PyTorch module's shapes."""
    ks = jax.random.split(key, 7)
    bound = 1.0 / jnp.sqrt(HIDDEN_DIM)
    emb_table = jax.random.normal(ks[0], (VOCAB_SIZE, EMBED_LEN), jnp.float32)
    w_ih = jax.random.uniform(ks[1], (HIDDEN_DIM, EMBED_LEN), jnp.float32, -bound, bound)
    w_hh = jax.random.uniform(ks[2], (HIDDEN_DIM, HIDDEN_DIM), jnp.float32, -bound, bound)
    b_ih = jax.random.uniform(ks[3], (HIDDEN_DIM,), jnp.float32, -bound, bound)
    b_hh = jax.random.uniform(ks[4], (HIDDEN_DIM,), jnp.float32, -bound, bound)
    w_lin = jax.random.uniform(ks[5], (N_CLASSES, HIDDEN_DIM), jnp.float32, -bound, bound)
    b_lin = jax.random.uniform(ks[6], (N_CLASSES,), jnp.float32, -bound, bound)
    return emb_table, w_ih, w_hh, b_ih, b_hh, w_lin, b_lin


if __name__ == "__main__":
    key = jax.random.PRNGKey(0)
    k_params, k_tokens, k_h0 = jax.random.split(key, 3)

    params = init_params(k_params)

    B, T = 2, 8
    tokens = jax.random.randint(k_tokens, (B, T), 0, VOCAB_SIZE, dtype=jnp.int32)

    # PyTorch forward uses torch.randn(n_layers, B, hidden_dim) as the initial hidden
    # state; here it is a deterministic standard-normal sample passed in explicitly.
    h0 = jax.random.normal(k_h0, (N_LAYERS, B, HIDDEN_DIM), jnp.float32)[0]  # (B, H)

    logits = rnn_classifier_forward(tokens, params, h0)
    jax.block_until_ready(logits)

    ref = rnn_classifier_reference(tokens, params, h0)
    assert logits.shape == (B, N_CLASSES) and logits.dtype == jnp.float32
    # All-f32 path (kernel MXU accumulates f32, reference at HIGHEST precision):
    # tolerance tightened from 1e-2 to 1e-4 (1e-5 typically holds).
    assert jnp.allclose(logits, ref, rtol=1e-4, atol=1e-4), (logits, ref)
    print("KERNEL_OK")
</pallas_src>

<mosaic_0001>
module attributes {stable_mosaic.version = 11 : i64} {
  func.func @rnn_classifier_kernel(%arg0: i32, %arg1: memref<1x8x8xi32, #tpu.memory_space<vmem>>, %arg2: memref<8x128xf32, #tpu.memory_space<vmem>>, %arg3: memref<128x128xf32, #tpu.memory_space<vmem>>, %arg4: memref<128x128xf32, #tpu.memory_space<vmem>>, %arg5: memref<128x128xf32, #tpu.memory_space<vmem>>, %arg6: memref<1x128xf32, #tpu.memory_space<vmem>>, %arg7: memref<128x128xf32, #tpu.memory_space<vmem>>, %arg8: memref<1x128xf32, #tpu.memory_space<vmem>>, %arg9: memref<8x128xf32, #tpu.memory_space<vmem>>, %arg10: memref<8x8x128xf32, #tpu.memory_space<vmem>>) attributes {dimension_semantics = [#tpu.dimension_semantics<parallel>], iteration_bounds = array<i64: 1>, scalar_prefetch = 0 : i64, scratch_operands = 1 : i64, tpu.core_type = #tpu.core_type<tc>, window_params = [{transform_indices = @transform_0, window_bounds = array<i64: 1, 8, 8>}, {transform_indices = @transform_1, window_bounds = array<i64: 8, 128>}, {pipeline_mode = #tpu.pipeline_mode<synchronous>, transform_indices = @transform_2, window_bounds = array<i64: 128, 128>}, {pipeline_mode = #tpu.pipeline_mode<synchronous>, transform_indices = @transform_3, window_bounds = array<i64: 128, 128>}, {pipeline_mode = #tpu.pipeline_mode<synchronous>, transform_indices = @transform_4, window_bounds = array<i64: 128, 128>}, {pipeline_mode = #tpu.pipeline_mode<synchronous>, transform_indices = @transform_5, window_bounds = array<i64: 1, 128>}, {pipeline_mode = #tpu.pipeline_mode<synchronous>, transform_indices = @transform_6, window_bounds = array<i64: 128, 128>}, {pipeline_mode = #tpu.pipeline_mode<synchronous>, transform_indices = @transform_7, window_bounds = array<i64: 1, 128>}, {transform_indices = @transform_8, window_bounds = array<i64: 8, 128>}]} {
    %c0 = arith.constant 0 : index
    %c0_0 = arith.constant 0 : index
    %c0_1 = arith.constant 0 : index
    %0 = vector.load %arg1[%c0, %c0_0, %c0_1] : memref<1x8x8xi32, #tpu.memory_space<vmem>>, vector<1x8x8xi32>
    %1 = vector.shape_cast %0 : vector<1x8x8xi32> to vector<8x8xi32>
    %2 = tpu.iota {dimensions = array<i32: 2>} : vector<8x8x128xi32>
    %3 = vector.shape_cast %1 : vector<8x8xi32> to vector<8x8x1xi32>
    %4 = vector.broadcast %3 : vector<8x8x1xi32> to vector<8x8x128xi32>
    %5 = arith.cmpi eq, %4, %2 : vector<8x8x128xi32>
    %6 = arith.extui %5 : vector<8x8x128xi1> to vector<8x8x128xi32>
    %7 = arith.sitofp %6 : vector<8x8x128xi32> to vector<8x8x128xf32>
    %8 = vector.shape_cast %7 : vector<8x8x128xf32> to vector<64x128xf32>
    %c0_2 = arith.constant 0 : index
    %c0_3 = arith.constant 0 : index
    %9 = vector.load %arg3[%c0_2, %c0_3] : memref<128x128xf32, #tpu.memory_space<vmem>>, vector<128x128xf32>
    %cst = arith.constant dense<0.000000e+00> : vector<64x128xf32>
    %10 = tpu.matmul %8, %9, %cst {dimension_numbers = #tpu.dot_dimension_numbers<[1], [0], [0], [1], [0, 0, 1, 1], [], []>} : vector<64x128xf32>, vector<128x128xf32>, vector<64x128xf32> -> vector<64x128xf32>
    %c0_4 = arith.constant 0 : index
    %c0_5 = arith.constant 0 : index
    %11 = vector.load %arg4[%c0_4, %c0_5] : memref<128x128xf32, #tpu.memory_space<vmem>>, vector<128x128xf32>
    %cst_6 = arith.constant dense<0.000000e+00> : vector<64x128xf32>
    %12 = tpu.matmul %10, %11, %cst_6 {dimension_numbers = #tpu.dot_dimension_numbers<[1], [0], [0], [1], [0, 0, 1, 1], [], []>} : vector<64x128xf32>, vector<128x128xf32>, vector<64x128xf32> -> vector<64x128xf32>
    %c0_7 = arith.constant 0 : index
    %c0_8 = arith.constant 0 : index
    %13 = vector.load %arg6[%c0_7, %c0_8] : memref<1x128xf32, #tpu.memory_space<vmem>>, vector<1x128xf32>
    %14 = vector.broadcast %13 : vector<1x128xf32> to vector<64x128xf32>
    %15 = arith.addf %12, %14 : vector<64x128xf32>
    %16 = vector.shape_cast %15 : vector<64x128xf32> to vector<8x8x128xf32>
    %c0_9 = arith.constant 0 : index
    %c0_10 = arith.constant 0 : index
    %c0_11 = arith.constant 0 : index
    %17 = vector.load %arg10[%c0_9, %c0_10, %c0_11] : memref<8x8x128xf32, #tpu.memory_space<vmem>>, vector<8x8x128xf32>
    tpu.vector_store %arg10[%c0_9, %c0_10, %c0_11], %16 {strides = array<i32>} : memref<8x8x128xf32, #tpu.memory_space<vmem>>, vector<8x8x128xf32>,
    %c0_12 = arith.constant 0 : index
    %c0_13 = arith.constant 0 : index
    %18 = vector.load %arg5[%c0_12, %c0_13] : memref<128x128xf32, #tpu.memory_space<vmem>>, vector<128x128xf32>
    %c0_14 = arith.constant 0 : index
    %c0_15 = arith.constant 0 : index
    %19 = vector.load %arg2[%c0_14, %c0_15] : memref<8x128xf32, #tpu.memory_space<vmem>>, vector<8x128xf32>
    %c0_i32 = arith.constant 0 : i32
    %20 = arith.index_cast %c0_i32 : i32 to index
    %c0_16 = arith.constant 0 : index
    %c0_17 = arith.constant 0 : index
    %21 = vector.load %arg10[%20, %c0_16, %c0_17] : memref<8x8x128xf32, #tpu.memory_space<vmem>>, vector<1x8x128xf32>
    %22 = vector.shape_cast %21 : vector<1x8x128xf32> to vector<8x128xf32>
    %cst_18 = arith.constant dense<0.000000e+00> : vector<8x128xf32>
    %23 = tpu.matmul %19, %18, %cst_18 {dimension_numbers = #tpu.dot_dimension_numbers<[1], [0], [0], [1], [0, 0, 1, 1], [], []>} : vector<8x128xf32>, vector<128x128xf32>, vector<8x128xf32> -> vector<8x128xf32>
    %24 = arith.addf %22, %23 : vector<8x128xf32>
    %25 = math.tanh %24 : vector<8x128xf32>
    %c1_i32 = arith.constant 1 : i32
    %26 = arith.index_cast %c1_i32 : i32 to index
    %c0_19 = arith.constant 0 : index
    %c0_20 = arith.constant 0 : index
    %27 = vector.load %arg10[%26, %c0_19, %c0_20] : memref<8x8x128xf32, #tpu.memory_space<vmem>>, vector<1x8x128xf32>
    %28 = vector.shape_cast %27 : vector<1x8x128xf32> to vector<8x128xf32>
    %cst_21 = arith.constant dense<0.000000e+00> : vector<8x128xf32>
    %29 = tpu.matmul %25, %18, %cst_21 {dimension_numbers = #tpu.dot_dimension_numbers<[1], [0], [0], [1], [0, 0, 1, 1], [], []>} : vector<8x128xf32>, vector<128x128xf32>, vector<8x128xf32> -> vector<8x128xf32>
    %30 = arith.addf %28, %29 : vector<8x128xf32>
    %31 = math.tanh %30 : vector<8x128xf32>
    %c2_i32 = arith.constant 2 : i32
    %32 = arith.index_cast %c2_i32 : i32 to index
    %c0_22 = arith.constant 0 : index
    %c0_23 = arith.constant 0 : index
    %33 = vector.load %arg10[%32, %c0_22, %c0_23] : memref<8x8x128xf32, #tpu.memory_space<vmem>>, vector<1x8x128xf32>
    %34 = vector.shape_cast %33 : vector<1x8x128xf32> to vector<8x128xf32>
    %cst_24 = arith.constant dense<0.000000e+00> : vector<8x128xf32>
    %35 = tpu.matmul %31, %18, %cst_24 {dimension_numbers = #tpu.dot_dimension_numbers<[1], [0], [0], [1], [0, 0, 1, 1], [], []>} : vector<8x128xf32>, vector<128x128xf32>, vector<8x128xf32> -> vector<8x128xf32>
    %36 = arith.addf %34, %35 : vector<8x128xf32>
    %37 = math.tanh %36 : vector<8x128xf32>
    %c3_i32 = arith.constant 3 : i32
    %38 = arith.index_cast %c3_i32 : i32 to index
    %c0_25 = arith.constant 0 : index
    %c0_26 = arith.constant 0 : index
    %39 = vector.load %arg10[%38, %c0_25, %c0_26] : memref<8x8x128xf32, #tpu.memory_space<vmem>>, vector<1x8x128xf32>
    %40 = vector.shape_cast %39 : vector<1x8x128xf32> to vector<8x128xf32>
    %cst_27 = arith.constant dense<0.000000e+00> : vector<8x128xf32>
    %41 = tpu.matmul %37, %18, %cst_27 {dimension_numbers = #tpu.dot_dimension_numbers<[1], [0], [0], [1], [0, 0, 1, 1], [], []>} : vector<8x128xf32>, vector<128x128xf32>, vector<8x128xf32> -> vector<8x128xf32>
    %42 = arith.addf %40, %41 : vector<8x128xf32>
    %43 = math.tanh %42 : vector<8x128xf32>
    %c4_i32 = arith.constant 4 : i32
    %44 = arith.index_cast %c4_i32 : i32 to index
    %c0_28 = arith.constant 0 : index
    %c0_29 = arith.constant 0 : index
    %45 = vector.load %arg10[%44, %c0_28, %c0_29] : memref<8x8x128xf32, #tpu.memory_space<vmem>>, vector<1x8x128xf32>
    %46 = vector.shape_cast %45 : vector<1x8x128xf32> to vector<8x128xf32>
    %cst_30 = arith.constant dense<0.000000e+00> : vector<8x128xf32>
    %47 = tpu.matmul %43, %18, %cst_30 {dimension_numbers = #tpu.dot_dimension_numbers<[1], [0], [0], [1], [0, 0, 1, 1], [], []>} : vector<8x128xf32>, vector<128x128xf32>, vector<8x128xf32> -> vector<8x128xf32>
    %48 = arith.addf %46, %47 : vector<8x128xf32>
    %49 = math.tanh %48 : vector<8x128xf32>
    %c5_i32 = arith.constant 5 : i32
    %50 = arith.index_cast %c5_i32 : i32 to index
    %c0_31 = arith.constant 0 : index
    %c0_32 = arith.constant 0 : index
    %51 = vector.load %arg10[%50, %c0_31, %c0_32] : memref<8x8x128xf32, #tpu.memory_space<vmem>>, vector<1x8x128xf32>
    %52 = vector.shape_cast %51 : vector<1x8x128xf32> to vector<8x128xf32>
    %cst_33 = arith.constant dense<0.000000e+00> : vector<8x128xf32>
    %53 = tpu.matmul %49, %18, %cst_33 {dimension_numbers = #tpu.dot_dimension_numbers<[1], [0], [0], [1], [0, 0, 1, 1], [], []>} : vector<8x128xf32>, vector<128x128xf32>, vector<8x128xf32> -> vector<8x128xf32>
    %54 = arith.addf %52, %53 : vector<8x128xf32>
    %55 = math.tanh %54 : vector<8x128xf32>
    %c6_i32 = arith.constant 6 : i32
    %56 = arith.index_cast %c6_i32 : i32 to index
    %c0_34 = arith.constant 0 : index
    %c0_35 = arith.constant 0 : index
    %57 = vector.load %arg10[%56, %c0_34, %c0_35] : memref<8x8x128xf32, #tpu.memory_space<vmem>>, vector<1x8x128xf32>
    %58 = vector.shape_cast %57 : vector<1x8x128xf32> to vector<8x128xf32>
    %cst_36 = arith.constant dense<0.000000e+00> : vector<8x128xf32>
    %59 = tpu.matmul %55, %18, %cst_36 {dimension_numbers = #tpu.dot_dimension_numbers<[1], [0], [0], [1], [0, 0, 1, 1], [], []>} : vector<8x128xf32>, vector<128x128xf32>, vector<8x128xf32> -> vector<8x128xf32>
    %60 = arith.addf %58, %59 : vector<8x128xf32>
    %61 = math.tanh %60 : vector<8x128xf32>
    %c7_i32 = arith.constant 7 : i32
    %62 = arith.index_cast %c7_i32 : i32 to index
    %c0_37 = arith.constant 0 : index
    %c0_38 = arith.constant 0 : index
    %63 = vector.load %arg10[%62, %c0_37, %c0_38] : memref<8x8x128xf32, #tpu.memory_space<vmem>>, vector<1x8x128xf32>
    %64 = vector.shape_cast %63 : vector<1x8x128xf32> to vector<8x128xf32>
    %cst_39 = arith.constant dense<0.000000e+00> : vector<8x128xf32>
    %65 = tpu.matmul %61, %18, %cst_39 {dimension_numbers = #tpu.dot_dimension_numbers<[1], [0], [0], [1], [0, 0, 1, 1], [], []>} : vector<8x128xf32>, vector<128x128xf32>, vector<8x128xf32> -> vector<8x128xf32>
    %66 = arith.addf %64, %65 : vector<8x128xf32>
    %67 = math.tanh %66 : vector<8x128xf32>
    %c8_i32 = arith.constant 8 : i32
    %c0_40 = arith.constant 0 : index
    %c0_41 = arith.constant 0 : index
    %68 = vector.load %arg7[%c0_40, %c0_41] : memref<128x128xf32, #tpu.memory_space<vmem>>, vector<128x128xf32>
    %cst_42 = arith.constant dense<0.000000e+00> : vector<8x128xf32>
    %69 = tpu.matmul %67, %68, %cst_42 {dimension_numbers = #tpu.dot_dimension_numbers<[1], [0], [0], [1], [0, 0, 1, 1], [], []>} : vector<8x128xf32>, vector<128x128xf32>, vector<8x128xf32> -> vector<8x128xf32>
    %c0_43 = arith.constant 0 : index
    %c0_44 = arith.constant 0 : index
    %70 = vector.load %arg8[%c0_43, %c0_44] : memref<1x128xf32, #tpu.memory_space<vmem>>, vector<1x128xf32>
    %71 = vector.broadcast %70 : vector<1x128xf32> to vector<8x128xf32>
    %72 = arith.addf %69, %71 : vector<8x128xf32>
    %c0_45 = arith.constant 0 : index
    %c0_46 = arith.constant 0 : index
    %73 = vector.load %arg9[%c0_45, %c0_46] : memref<8x128xf32, #tpu.memory_space<vmem>>, vector<8x128xf32>
    tpu.vector_store %arg9[%c0_45, %c0_46], %72 {strides = array<i32>} : memref<8x128xf32, #tpu.memory_space<vmem>>, vector<8x128xf32>,
    return
  }
  func.func @transform_0(%arg0: i32) -> (i32, i32, i32) {
    %c0_i32 = arith.constant 0 : i32
    %c0_i32_0 = arith.constant 0 : i32
    %c0_i32_1 = arith.constant 0 : i32
    return %arg0, %c0_i32, %c0_i32_0 : i32, i32, i32
  }
  func.func @transform_1(%arg0: i32) -> (i32, i32) {
    %c0_i32 = arith.constant 0 : i32
    %c0_i32_0 = arith.constant 0 : i32
    return %arg0, %c0_i32 : i32, i32
  }
  func.func @transform_2(%arg0: i32) -> (i32, i32) {
    %c0_i32 = arith.constant 0 : i32
    %c0_i32_0 = arith.constant 0 : i32
    %c0_i32_1 = arith.constant 0 : i32
    return %c0_i32, %c0_i32_0 : i32, i32
  }
  func.func @transform_3(%arg0: i32) -> (i32, i32) {
    %c0_i32 = arith.constant 0 : i32
    %c0_i32_0 = arith.constant 0 : i32
    %c0_i32_1 = arith.constant 0 : i32
    return %c0_i32, %c0_i32_0 : i32, i32
  }
  func.func @transform_4(%arg0: i32) -> (i32, i32) {
    %c0_i32 = arith.constant 0 : i32
    %c0_i32_0 = arith.constant 0 : i32
    %c0_i32_1 = arith.constant 0 : i32
    return %c0_i32, %c0_i32_0 : i32, i32
  }
  func.func @transform_5(%arg0: i32) -> (i32, i32) {
    %c0_i32 = arith.constant 0 : i32
    %c0_i32_0 = arith.constant 0 : i32
    %c0_i32_1 = arith.constant 0 : i32
    return %c0_i32, %c0_i32_0 : i32, i32
  }
  func.func @transform_6(%arg0: i32) -> (i32, i32) {
    %c0_i32 = arith.constant 0 : i32
    %c0_i32_0 = arith.constant 0 : i32
    %c0_i32_1 = arith.constant 0 : i32
    return %c0_i32, %c0_i32_0 : i32, i32
  }
  func.func @transform_7(%arg0: i32) -> (i32, i32) {
    %c0_i32 = arith.constant 0 : i32
    %c0_i32_0 = arith.constant 0 : i32
    %c0_i32_1 = arith.constant 0 : i32
    return %c0_i32, %c0_i32_0 : i32, i32
  }
  func.func @transform_8(%arg0: i32) -> (i32, i32) {
    %c0_i32 = arith.constant 0 : i32
    %c0_i32_0 = arith.constant 0 : i32
    return %arg0, %c0_i32 : i32, i32
  }
}

</mosaic_0001>

<llo_original>
// kernel: tpu_custom_call.1
$region0: #{tpu_custom_call.1}
  #allocation0 [shape = 'u32[]', space=smem, size = 0x4, offset = 0x4, fixed_abs, tag = 'smem constant byte address 0x4 - core index']
  #allocation1 [shape = 'u32[144,128]{1,0:T(1,128)}', space=vmem, size = 0x12000, scoped, tag = 'internal scratch']
  #allocation2 [shape = 'f32[8,8,128]{2,1,0:T(8,128)}', space=vmem, size = 0x8000, scoped, tag = 'scratch operand']
  %s0 = inlined_call_operand.hbm [shape: s32[1,8,8], index: 0, kind: input, shape index: {}]
  %s1 = inlined_call_operand.hbm [shape: f32[8,128], index: 1, kind: input, shape index: {}]
  %s2 = inlined_call_operand.hbm [shape: f32[128,128], index: 2, kind: input, shape index: {}]
  %s3 = inlined_call_operand.hbm [shape: f32[128,128], index: 3, kind: input, shape index: {}]
  %s4 = inlined_call_operand.hbm [shape: f32[128,128], index: 4, kind: input, shape index: {}]
  %s5 = inlined_call_operand.vmem [shape: f32[1,128], index: 5, kind: input, shape index: {}]
  %s6 = inlined_call_operand.hbm [shape: f32[128,128], index: 6, kind: input, shape index: {}]
  %s7 = inlined_call_operand.vmem [shape: f32[1,128], index: 7, kind: input, shape index: {}]
  %s8 = inlined_call_operand.hbm [shape: f32[8,128], index: 8, kind: output, shape index: {}]
  %s9 = sld [smem:[#allocation0]]
  $region66: #{tpu_custom_call.1} parent=0
    _
  %s11 = ssub.s32 1, %s9
  %s12 = scalar_select 0, %s11, %s9
  $region1: #{tpu_custom_call.1} parent=0
    #allocation3 [shape = 'u8[4096]{0}', space=vmem, size = 0x1000, scoped, tag = 'input window, operand 0, single buffered']
    #allocation4 [shape = 's32[1]{0}', space=sflag, size = 0x4, scoped, tag = 'scoped memory for tpu_custom_call.1']
    #allocation5 [shape = 's32[1]{0}', space=sflag, size = 0x4, scoped, tag = 'scoped memory for tpu_custom_call.1']
    #allocation6 [shape = 'u8[4096]{0}', space=vmem, size = 0x1000, scoped, tag = 'input window, operand 1, single buffered']
    #allocation7 [shape = 's32[1]{0}', space=sflag, size = 0x4, scoped, tag = 'scoped memory for tpu_custom_call.1']
    #allocation8 [shape = 'u8[65536]{0}', space=vmem, size = 0x10000, scoped, tag = 'input window, operand 2, single buffered']
    #allocation9 [shape = 'u8[65536]{0}', space=vmem, size = 0x10000, scoped, tag = 'input window, operand 3, single buffered']
    #allocation10 [shape = 's32[1]{0}', space=sflag, size = 0x4, scoped, tag = 'scoped memory for tpu_custom_call.1']
    #allocation11 [shape = 'u8[65536]{0}', space=vmem, size = 0x10000, scoped, tag = 'input window, operand 4, single buffered']
    #allocation12 [shape = 'u8[65536]{0}', space=vmem, size = 0x10000, scoped, tag = 'input window, operand 6, single buffered']
    #allocation13 [shape = 's32[1]{0}', space=sflag, size = 0x4, scoped, tag = 'scoped memory for tpu_custom_call.1']
    #allocation14 [shape = 'u8[4096]{0}', space=vmem, size = 0x1000, scoped, tag = 'output window, operand 0, single buffered']
    %13 = vsyncpa [#allocation4], 0
    %14 = vsyncpa [#allocation7], 0
    %15 = vsyncpa [#allocation10], 0
    %16 = vsyncpa [#allocation13], 0
    %17 = vsyncpa [#allocation5], 0
    // Predicated region
    $region2: #{tpu_custom_call.1} parent=1 // pred_check
      _
    $region3: #{tpu_custom_call.1} parent=1 // pred_check_branch
      %19 = sbr.rel (0) target = $region5
    $region4: #{tpu_custom_call.1} parent=1 // pred_region
      %s21 = ssub.s32 128, 128
      %22 = vsyncadd [#allocation4], %s21
      %s24 = sshll.u32 [#allocation3], 4
      %s25 = int_to_ptr.vmem [resolvable:$true] %s24
      %27 = dma.hbm_to_vmem [thread:$0]  %s0, 128, %s25, [#allocation4]
    $region5: #{tpu_custom_call.1} parent=1 // pred_fallthru
      _
    // Predicated region
    $region6: #{tpu_custom_call.1} parent=1 // pred_check
      _
    $region7: #{tpu_custom_call.1} parent=1 // pred_check_branch
      %29 = sbr.rel (0) target = $region9
    $region8: #{tpu_custom_call.1} parent=1 // pred_region
      %s31 = ssub.s32 128, 128
      %32 = vsyncadd [#allocation7], %s31
      %s34 = sshll.u32 [#allocation6], 4
      %s35 = int_to_ptr.vmem [resolvable:$true] %s34
      %37 = dma.hbm_to_vmem [thread:$0]  %s1, 128, %s35, [#allocation7]
    $region9: #{tpu_custom_call.1} parent=1 // pred_fallthru
      _
    // Predicated region
    $region10: #{tpu_custom_call.1} parent=1 // pred_check
      _
    $region11: #{tpu_custom_call.1} parent=1 // pred_check_branch
      %39 = sbr.rel (0) target = $region13
    $region12: #{tpu_custom_call.1} parent=1 // pred_region
      %s41 = ssub.s32 2048, 2048
      %42 = vsyncadd [#allocation7], %s41
      %s43 = sshll.u32 [#allocation8], 4
      %s44 = int_to_ptr.vmem [resolvable:$true] %s43
      %49 = dma.hbm_to_vmem [thread:$0]  %s2, 2048, %s44, [#allocation7], 128, 128, 8
    $region13: #{tpu_custom_call.1} parent=1 // pred_fallthru
      _
    // Predicated region
    $region14: #{tpu_custom_call.1} parent=1 // pred_check
      _
    $region15: #{tpu_custom_call.1} parent=1 // pred_check_branch
      %51 = sbr.rel (0) target = $region17
    $region16: #{tpu_custom_call.1} parent=1 // pred_region
      %s53 = ssub.s32 2048, 2048
      %54 = vsyncadd [#allocation10], %s53
      %s55 = sshll.u32 [#allocation9], 4
      %s56 = int_to_ptr.vmem [resolvable:$true] %s55
      %61 = dma.hbm_to_vmem [thread:$0]  %s3, 2048, %s56, [#allocation10], 128, 128, 8
    $region17: #{tpu_custom_call.1} parent=1 // pred_fallthru
      _
    // Predicated region
    $region18: #{tpu_custom_call.1} parent=1 // pred_check
      _
    $region19: #{tpu_custom_call.1} parent=1 // pred_check_branch
      %63 = sbr.rel (0) target = $region21
    $region20: #{tpu_custom_call.1} parent=1 // pred_region
      %s65 = ssub.s32 2048, 2048
      %66 = vsyncadd [#allocation10], %s65
      %s67 = sshll.u32 [#allocation11], 4
      %s68 = int_to_ptr.vmem [resolvable:$true] %s67
      %73 = dma.hbm_to_vmem [thread:$0]  %s4, 2048, %s68, [#allocation10], 128, 128, 8
    $region21: #{tpu_custom_call.1} parent=1 // pred_fallthru
      _
    // Predicated region
    $region22: #{tpu_custom_call.1} parent=1 // pred_check
      _
    $region23: #{tpu_custom_call.1} parent=1 // pred_check_branch
      %75 = sbr.rel (0) target = $region25
    $region24: #{tpu_custom_call.1} parent=1 // pred_region
      _
    $region25: #{tpu_custom_call.1} parent=1 // pred_fallthru
      _
    // Predicated region
    $region26: #{tpu_custom_call.1} parent=1 // pred_check
      _
    $region27: #{tpu_custom_call.1} parent=1 // pred_check_branch
      %77 = sbr.rel (0) target = $region29
    $region28: #{tpu_custom_call.1} parent=1 // pred_region
      %s79 = ssub.s32 2048, 2048
      %80 = vsyncadd [#allocation13], %s79
      %s81 = sshll.u32 [#allocation12], 4
      %s82 = int_to_ptr.vmem [resolvable:$true] %s81
      %87 = dma.hbm_to_vmem [thread:$0]  %s6, 2048, %s82, [#allocation13], 128, 128, 8
    $region29: #{tpu_custom_call.1} parent=1 // pred_fallthru
      _
    // Predicated region
    $region30: #{tpu_custom_call.1} parent=1 // pred_check
      _
    $region31: #{tpu_custom_call.1} parent=1 // pred_check_branch
      %89 = sbr.rel (0) target = $region33
    $region32: #{tpu_custom_call.1} parent=1 // pred_region
      _
    $region33: #{tpu_custom_call.1} parent=1 // pred_fallthru
      _
    // Predicated region
    $region34: #{tpu_custom_call.1} parent=1 // pred_check
      _
    $region35: #{tpu_custom_call.1} parent=1 // pred_check_branch
      %91 = sbr.rel (0) target = $region37
    $region36: #{tpu_custom_call.1} parent=1 // pred_region
      %92 = dma.done [#allocation4], 128
    $region37: #{tpu_custom_call.1} parent=1 // pred_fallthru
      _
    // Predicated region
    $region38: #{tpu_custom_call.1} parent=1 // pred_check
      _
    $region39: #{tpu_custom_call.1} parent=1 // pred_check_branch
      %94 = sbr.rel (0) target = $region41
    $region40: #{tpu_custom_call.1} parent=1 // pred_region
      %95 = dma.done [#allocation7], 128
    $region41: #{tpu_custom_call.1} parent=1 // pred_fallthru
      _
    // Predicated region
    $region42: #{tpu_custom_call.1} parent=1 // pred_check
      _
    $region43: #{tpu_custom_call.1} parent=1 // pred_check_branch
      %97 = sbr.rel (0) target = $region45
    $region44: #{tpu_custom_call.1} parent=1 // pred_region
      %98 = dma.done [#allocation7], 2048
    $region45: #{tpu_custom_call.1} parent=1 // pred_fallthru
      _
    // Predicated region
    $region46: #{tpu_custom_call.1} parent=1 // pred_check
      _
    $region47: #{tpu_custom_call.1} parent=1 // pred_check_branch
      %100 = sbr.rel (0) target = $region49
    $region48: #{tpu_custom_call.1} parent=1 // pred_region
      %101 = dma.done [#allocation10], 2048
    $region49: #{tpu_custom_call.1} parent=1 // pred_fallthru
      _
    // Predicated region
    $region50: #{tpu_custom_call.1} parent=1 // pred_check
      _
    $region51: #{tpu_custom_call.1} parent=1 // pred_check_branch
      %103 = sbr.rel (0) target = $region53
    $region52: #{tpu_custom_call.1} parent=1 // pred_region
      %104 = dma.done [#allocation10], 2048
    $region53: #{tpu_custom_call.1} parent=1 // pred_fallthru
      _
    // Predicated region
    $region54: #{tpu_custom_call.1} parent=1 // pred_check
      _
    $region55: #{tpu_custom_call.1} parent=1 // pred_check_branch
      %106 = sbr.rel (0) target = $region57
    $region56: #{tpu_custom_call.1} parent=1 // pred_region
      %107 = dma.done [#allocation13], 2048
    $region57: #{tpu_custom_call.1} parent=1 // pred_fallthru
      _
    %v108 = vld [vmem:[#allocation3] sm:$0xff]
    %v109 = vlaneseq
    %v110 = vand.u32 %v109, 127
    %v111 = vlaneseq
    %v112 = vshrl.u32 %v111, 7
    %v113 = vsub.s32 0, %v112
    %v114 = vrot.slane %v108, %v113
    %116 = vbcast.lane.b32.xlu0 %v114, 256
    %v117 = vpop.permute.xlu0 %116
    %v118 = vlaneseq
    %v119 = vshrl.u32 %v118, 7
    %v120 = vsub.s32 1, %v119
    %v121 = vrot.slane %v108, %v120
    %123 = vbcast.lane.b32.xlu0 %v121, 256
    %v124 = vpop.permute.xlu0 %123
    %v125 = vlaneseq
    %v126 = vshrl.u32 %v125, 7
    %v127 = vsub.s32 2, %v126
    %v128 = vrot.slane %v108, %v127
    %130 = vbcast.lane.b32.xlu0 %v128, 256
    %v131 = vpop.permute.xlu0 %130
    %v132 = vlaneseq
    %v133 = vshrl.u32 %v132, 7
    %v134 = vsub.s32 3, %v133
    %v135 = vrot.slane %v108, %v134
    %137 = vbcast.lane.b32.xlu0 %v135, 256
    %v138 = vpop.permute.xlu0 %137
    %v139 = vlaneseq
    %v140 = vshrl.u32 %v139, 7
    %v141 = vsub.s32 4, %v140
    %v142 = vrot.slane %v108, %v141
    %144 = vbcast.lane.b32.xlu0 %v142, 256
    %v145 = vpop.permute.xlu0 %144
    %v146 = vlaneseq
    %v147 = vshrl.u32 %v146, 7
    %v148 = vsub.s32 5, %v147
    %v149 = vrot.slane %v108, %v148
    %151 = vbcast.lane.b32.xlu0 %v149, 256
    %v152 = vpop.permute.xlu0 %151
    %v153 = vlaneseq
    %v154 = vshrl.u32 %v153, 7
    %v155 = vsub.s32 6, %v154
    %v156 = vrot.slane %v108, %v155
    %158 = vbcast.lane.b32.xlu0 %v156, 256
    %v159 = vpop.permute.xlu0 %158
    %v160 = vlaneseq
    %v161 = vshrl.u32 %v160, 7
    %v162 = vsub.s32 7, %v161
    %v163 = vrot.slane %v108, %v162
    %165 = vbcast.lane.b32.xlu0 %v163, 256
    %v166 = vpop.permute.xlu0 %165
    %vm167 = vcmp.eq.s32.totalorder %v117, %v110
    %vm168 = vcmp.eq.s32.totalorder %v124, %v110
    %vm169 = vcmp.eq.s32.totalorder %v131, %v110
    %vm170 = vcmp.eq.s32.totalorder %v138, %v110
    %vm171 = vcmp.eq.s32.totalorder %v145, %v110
    %vm172 = vcmp.eq.s32.totalorder %v152, %v110
    %vm173 = vcmp.eq.s32.totalorder %v159, %v110
    %vm174 = vcmp.eq.s32.totalorder %v166, %v110
    %v175 = vsel %vm167, 1, 0
    %v176 = vsel %vm168, 1, 0
    %v177 = vsel %vm169, 1, 0
    %v178 = vsel %vm170, 1, 0
    %v179 = vsel %vm171, 1, 0
    %v180 = vsel %vm172, 1, 0
    %v181 = vsel %vm173, 1, 0
    %v182 = vsel %vm174, 1, 0
    %v183 = vcvt.s32.f32 %v175
    %v184 = vcvt.s32.f32 %v176
    %v185 = vcvt.s32.f32 %v177
    %v186 = vcvt.s32.f32 %v178
    %v187 = vcvt.s32.f32 %v179
    %v188 = vcvt.s32.f32 %v180
    %v189 = vcvt.s32.f32 %v181
    %v190 = vcvt.s32.f32 %v182
    %v191 = vld [vmem:[#allocation8] sm:$0xff]
    %v192 = vld [vmem:[#allocation8 + $0x8] sm:$0xff]
    %v193 = vld [vmem:[#allocation8 + $0x10] sm:$0xff]
    %v194 = vld [vmem:[#allocation8 + $0x18] sm:$0xff]
    %v195 = vld [vmem:[#allocation8 + $0x20] sm:$0xff]
    %v196 = vld [vmem:[#allocation8 + $0x28] sm:$0xff]
    %v197 = vld [vmem:[#allocation8 + $0x30] sm:$0xff]
    %v198 = vld [vmem:[#allocation8 + $0x38] sm:$0xff]
    %v199 = vld [vmem:[#allocation8 + $0x40] sm:$0xff]
    %v200 = vld [vmem:[#allocation8 + $0x48] sm:$0xff]
    %v201 = vld [vmem:[#allocation8 + $0x50] sm:$0xff]
    %v202 = vld [vmem:[#allocation8 + $0x58] sm:$0xff]
    %v203 = vld [vmem:[#allocation8 + $0x60] sm:$0xff]
    %v204 = vld [vmem:[#allocation8 + $0x68] sm:$0xff]
    %v205 = vld [vmem:[#allocation8 + $0x70] sm:$0xff]
    %v206 = vld [vmem:[#allocation8 + $0x78] sm:$0xff]
    %207 = vmatprep.subr.mxu0 0.0
    %208 = vmatpush1.msra.mxu0 %v191
    %209 = vmatprep.subr.mxu0 0.0
    %210 = vmatpush1.msra.mxu0 %v192
    %211 = vmatprep.subr.mxu0 0.0
    %212 = vmatpush1.msra.mxu0 %v193
    %213 = vmatprep.subr.mxu0 0.0
    %214 = vmatpush1.msra.mxu0 %v194
    %215 = vmatprep.subr.mxu0 0.0
    %216 = vmatpush1.msra.mxu0 %v195
    %217 = vmatprep.subr.mxu0 0.0
    %218 = vmatpush1.msra.mxu0 %v196
    %219 = vmatprep.subr.mxu0 0.0
    %220 = vmatpush1.msra.mxu0 %v197
    %221 = vmatprep.subr.mxu0 0.0
    %222 = vmatpush1.msra.mxu0 %v198
    %223 = vmatprep.subr.mxu0 0.0
    %224 = vmatpush1.msra.mxu0 %v199
    %225 = vmatprep.subr.mxu0 0.0
    %226 = vmatpush1.msra.mxu0 %v200
    %227 = vmatprep.subr.mxu0 0.0
    %228 = vmatpush1.msra.mxu0 %v201
    %229 = vmatprep.subr.mxu0 0.0
    %230 = vmatpush1.msra.mxu0 %v202
    %231 = vmatprep.subr.mxu0 0.0
    %232 = vmatpush1.msra.mxu0 %v203
    %233 = vmatprep.subr.mxu0 0.0
    %234 = vmatpush1.msra.mxu0 %v204
    %235 = vmatprep.subr.mxu0 0.0
    %236 = vmatpush1.msra.mxu0 %v205
    %237 = vmatprep.subr.mxu0 0.0
    %238 = vmatpush1.msra.mxu0 %v206
    %239 = vmatprep.subr.mxu0 0.0
    %240 = vmatpush1.msra.mxu0 0.0
    %241 = vmatprep.subr.mxu0 0.0
    %242 = vmatpush1.msra.mxu0 0.0
    %243 = vmatprep.subr.mxu0 0.0
    %244 = vmatpush1.msra.mxu0 0.0
    %245 = vmatprep.subr.mxu0 0.0
    %246 = vmatpush1.msra.mxu0 0.0
    %247 = vmatprep.subr.mxu0 0.0
    %248 = vmatpush1.msra.mxu0 0.0
    %249 = vmatprep.subr.mxu0 0.0
    %250 = vmatpush1.msra.mxu0 0.0
    %251 = vmatprep.subr.mxu0 0.0
    %252 = vmatpush1.msra.mxu0 0.0
    %253 = vmatprep.subr.mxu0 0.0
    %254 = vmatpush1.msra.mxu0 0.0
    %255 = vmatprep.subr.mxu0 0.0
    %256 = vmatpush1.msra.mxu0 0.0
    %257 = vmatprep.subr.mxu0 0.0
    %258 = vmatpush1.msra.mxu0 0.0
    %259 = vmatprep.subr.mxu0 0.0
    %260 = vmatpush1.msra.mxu0 0.0
    %261 = vmatprep.subr.mxu0 0.0
    %262 = vmatpush1.msra.mxu0 0.0
    %263 = vmatprep.subr.mxu0 0.0
    %264 = vmatpush1.msra.mxu0 0.0
    %265 = vmatprep.subr.mxu0 0.0
    %266 = vmatpush1.msra.mxu0 0.0
    %267 = vmatprep.subr.mxu0 0.0
    %268 = vmatpush1.msra.mxu0 0.0
    %269 = vmatprep.subr.mxu0 0.0
    %270 = vmatpush1.msra.mxu0 0.0
    %271 = vmatprep.mubr.f32.mxu0 0.0
    %272 = vmatmul.mubr.f32.gmra.mrb[0].mxu0 %v183
    %v273 = vpop.f32.mrb[0].mxu0
    %v274 = vadd.f32 0.0, %v273
    %v275 = vpop.f32.mrb[0].mxu0
    %276 = vmatprep.mubr.f32.mxu0 0.0
    %277 = vmatmul.mubr.f32.gmra.mrb[0].mxu0 %v184
    %v278 = vpop.f32.mrb[0].mxu0
    %v279 = vadd.f32 0.0, %v278
    %v280 = vpop.f32.mrb[0].mxu0
    %281 = vmatprep.mubr.f32.mxu0 0.0
    %282 = vmatmul.mubr.f32.gmra.mrb[0].mxu0 %v185
    %v283 = vpop.f32.mrb[0].mxu0
    %v284 = vadd.f32 0.0, %v283
    %v285 = vpop.f32.mrb[0].mxu0
    %286 = vmatprep.mubr.f32.mxu0 0.0
    %287 = vmatmul.mubr.f32.gmra.mrb[0].mxu0 %v186
    %v288 = vpop.f32.mrb[0].mxu0
    %v289 = vadd.f32 0.0, %v288
    %v290 = vpop.f32.mrb[0].mxu0
    %291 = vmatprep.mubr.f32.mxu0 0.0
    %292 = vmatmul.mubr.f32.gmra.mrb[0].mxu0 %v187
    %v293 = vpop.f32.mrb[0].mxu0
    %v294 = vadd.f32 0.0, %v293
    %v295 = vpop.f32.mrb[0].mxu0
    %296 = vmatprep.mubr.f32.mxu0 0.0
    %297 = vmatmul.mubr.f32.gmra.mrb[0].mxu0 %v188
    %v298 = vpop.f32.mrb[0].mxu0
    %v299 = vadd.f32 0.0, %v298
    %v300 = vpop.f32.mrb[0].mxu0
    %301 = vmatprep.mubr.f32.mxu0 0.0
    %302 = vmatmul.mubr.f32.gmra.mrb[0].mxu0 %v189
    %v303 = vpop.f32.mrb[0].mxu0
    %v304 = vadd.f32 0.0, %v303
    %v305 = vpop.f32.mrb[0].mxu0
    %306 = vmatprep.mubr.f32.mxu0 0.0
    %307 = vmatmul.mubr.f32.gmra.mrb[0].mxu0 %v190
    %v308 = vpop.f32.mrb[0].mxu0
    %v309 = vadd.f32 0.0, %v308
    %v310 = vpop.f32.mrb[0].mxu0
    %311 = vdwg.mxu0
    %v312 = vld [vmem:[#allocation9] sm:$0xff]
    %v313 = vld [vmem:[#allocation9 + $0x8] sm:$0xff]
    %v314 = vld [vmem:[#allocation9 + $0x10] sm:$0xff]
    %v315 = vld [vmem:[#allocation9 + $0x18] sm:$0xff]
    %v316 = vld [vmem:[#allocation9 + $0x20] sm:$0xff]
    %v317 = vld [vmem:[#allocation9 + $0x28] sm:$0xff]
    %v318 = vld [vmem:[#allocation9 + $0x30] sm:$0xff]
    %v319 = vld [vmem:[#allocation9 + $0x38] sm:$0xff]
    %v320 = vld [vmem:[#allocation9 + $0x40] sm:$0xff]
    %v321 = vld [vmem:[#allocation9 + $0x48] sm:$0xff]
    %v322 = vld [vmem:[#allocation9 + $0x50] sm:$0xff]
    %v323 = vld [vmem:[#allocation9 + $0x58] sm:$0xff]
    %v324 = vld [vmem:[#allocation9 + $0x60] sm:$0xff]
    %v325 = vld [vmem:[#allocation9 + $0x68] sm:$0xff]
    %v326 = vld [vmem:[#allocation9 + $0x70] sm:$0xff]
    %v327 = vld [vmem:[#allocation9 + $0x78] sm:$0xff]
    %v328 = vld [vmem:[%s5] sm:$0x1]
    %v330 = vlaneseq
    %v331 = vshrl.u32 %v330, 7
    %v332 = vsub.s32 0, %v331
    %v333 = vrot.slane %v328, %v332
    %335 = vmatprep.subr.mxu0 0.0
    %336 = vmatpush1.msra.mxu0 %v312
    %337 = vmatprep.subr.mxu0 0.0
    %338 = vmatpush1.msra.mxu0 %v313
    %339 = vmatprep.subr.mxu0 0.0
    %340 = vmatpush1.msra.mxu0 %v314
    %341 = vmatprep.subr.mxu0 0.0
    %342 = vmatpush1.msra.mxu0 %v315
    %343 = vmatprep.subr.mxu0 0.0
    %344 = vmatpush1.msra.mxu0 %v316
    %345 = vmatprep.subr.mxu0 0.0
    %346 = vmatpush1.msra.mxu0 %v317
    %347 = vmatprep.subr.mxu0 0.0
    %348 = vmatpush1.msra.mxu0 %v318
    %349 = vmatprep.subr.mxu0 0.0
    %350 = vmatpush1.msra.mxu0 %v319
    %351 = vmatprep.subr.mxu0 0.0
    %352 = vmatpush1.msra.mxu0 %v320
    %353 = vmatprep.subr.mxu0 0.0
    %354 = vmatpush1.msra.mxu0 %v321
    %355 = vmatprep.subr.mxu0 0.0
    %356 = vmatpush1.msra.mxu0 %v322
    %357 = vmatprep.subr.mxu0 0.0
    %358 = vmatpush1.msra.mxu0 %v323
    %359 = vmatprep.subr.mxu0 0.0
    %360 = vmatpush1.msra.mxu0 %v324
    %361 = vmatprep.subr.mxu0 0.0
    %362 = vmatpush1.msra.mxu0 %v325
    %363 = vmatprep.subr.mxu0 0.0
    %364 = vmatpush1.msra.mxu0 %v326
    %365 = vmatprep.subr.mxu0 0.0
    %366 = vmatpush1.msra.mxu0 %v327
    %367 = vmatprep.subr.mxu0 0.0
    %368 = vmatpush1.msra.mxu0 0.0
    %369 = vmatprep.subr.mxu0 0.0
    %370 = vmatpush1.msra.mxu0 0.0
    %371 = vmatprep.subr.mxu0 0.0
    %372 = vmatpush1.msra.mxu0 0.0
    %373 = vmatprep.subr.mxu0 0.0
    %374 = vmatpush1.msra.mxu0 0.0
    %375 = vmatprep.subr.mxu0 0.0
    %376 = vmatpush1.msra.mxu0 0.0
    %377 = vmatprep.subr.mxu0 0.0
    %378 = vmatpush1.msra.mxu0 0.0
    %379 = vmatprep.subr.mxu0 0.0
    %380 = vmatpush1.msra.mxu0 0.0
    %381 = vmatprep.subr.mxu0 0.0
    %382 = vmatpush1.msra.mxu0 0.0
    %383 = vmatprep.subr.mxu0 0.0
    %384 = vmatpush1.msra.mxu0 0.0
    %385 = vmatprep.subr.mxu0 0.0
    %386 = vmatpush1.msra.mxu0 0.0
    %387 = vmatprep.subr.mxu0 0.0
    %388 = vmatpush1.msra.mxu0 0.0
    %389 = vmatprep.subr.mxu0 0.0
    %390 = vmatpush1.msra.mxu0 0.0
    %391 = vmatprep.subr.mxu0 0.0
    %392 = vmatpush1.msra.mxu0 0.0
    %393 = vmatprep.subr.mxu0 0.0
    %394 = vmatpush1.msra.mxu0 0.0
    %395 = vmatprep.subr.mxu0 0.0
    %396 = vmatpush1.msra.mxu0 0.0
    %397 = vmatprep.subr.mxu0 0.0
    %398 = vmatpush1.msra.mxu0 0.0
    %399 = vmatprep.mubr.f32.mxu0 0.0
    %400 = vmatmul.mubr.f32.gmra.mrb[0].mxu0 %v274
    %v401 = vpop.f32.mrb[0].mxu0
    %v402 = vadd.f32 %v333, %v401
    %v403 = vpop.f32.mrb[0].mxu0
    %404 = vmatprep.mubr.f32.mxu0 0.0
    %405 = vmatmul.mubr.f32.gmra.mrb[0].mxu0 %v279
    %v406 = vpop.f32.mrb[0].mxu0
    %v407 = vadd.f32 %v333, %v406
    %v408 = vpop.f32.mrb[0].mxu0
    %409 = vmatprep.mubr.f32.mxu0 0.0
    %410 = vmatmul.mubr.f32.gmra.mrb[0].mxu0 %v284
    %v411 = vpop.f32.mrb[0].mxu0
    %v412 = vadd.f32 %v333, %v411
    %v413 = vpop.f32.mrb[0].mxu0
    %414 = vmatprep.mubr.f32.mxu0 0.0
    %415 = vmatmul.mubr.f32.gmra.mrb[0].mxu0 %v289
    %v416 = vpop.f32.mrb[0].mxu0
    %v417 = vadd.f32 %v333, %v416
    %v418 = vpop.f32.mrb[0].mxu0
    %419 = vmatprep.mubr.f32.mxu0 0.0
    %420 = vmatmul.mubr.f32.gmra.mrb[0].mxu0 %v294
    %v421 = vpop.f32.mrb[0].mxu0
    %v422 = vadd.f32 %v333, %v421
    %v423 = vpop.f32.mrb[0].mxu0
    %424 = vmatprep.mubr.f32.mxu0 0.0
    %425 = vmatmul.mubr.f32.gmra.mrb[0].mxu0 %v299
    %v426 = vpop.f32.mrb[0].mxu0
    %v427 = vadd.f32 %v333, %v426
    %v428 = vpop.f32.mrb[0].mxu0
    %429 = vmatprep.mubr.f32.mxu0 0.0
    %430 = vmatmul.mubr.f32.gmra.mrb[0].mxu0 %v304
    %v431 = vpop.f32.mrb[0].mxu0
    %v432 = vadd.f32 %v333, %v431
    %v433 = vpop.f32.mrb[0].mxu0
    %434 = vmatprep.mubr.f32.mxu0 0.0
    %435 = vmatmul.mubr.f32.gmra.mrb[0].mxu0 %v309
    %v436 = vpop.f32.mrb[0].mxu0
    %v437 = vadd.f32 %v333, %v436
    %v438 = vpop.f32.mrb[0].mxu0
    %439 = vdwg.mxu0
    %440 = vst [vmem:[#allocation2] sm:$0xff] %v402
    %441 = vst [vmem:[#allocation2 + $0x8] sm:$0xff] %v407
    %442 = vst [vmem:[#allocation2 + $0x10] sm:$0xff] %v412
    %443 = vst [vmem:[#allocation2 + $0x18] sm:$0xff] %v417
    %444 = vst [vmem:[#allocation2 + $0x20] sm:$0xff] %v422
    %445 = vst [vmem:[#allocation2 + $0x28] sm:$0xff] %v427
    %446 = vst [vmem:[#allocation2 + $0x30] sm:$0xff] %v432
    %447 = vst [vmem:[#allocation2 + $0x38] sm:$0xff] %v437
    %v448 = vld [vmem:[#allocation11] sm:$0xff]
    %v449 = vld [vmem:[#allocation11 + $0x8] sm:$0xff]
    %v450 = vld [vmem:[#allocation11 + $0x10] sm:$0xff]
    %v451 = vld [vmem:[#allocation11 + $0x18] sm:$0xff]
    %v452 = vld [vmem:[#allocation11 + $0x20] sm:$0xff]
    %v453 = vld [vmem:[#allocation11 + $0x28] sm:$0xff]
    %v454 = vld [vmem:[#allocation11 + $0x30] sm:$0xff]
    %v455 = vld [vmem:[#allocation11 + $0x38] sm:$0xff]
    %v456 = vld [vmem:[#allocation11 + $0x40] sm:$0xff]
    %v457 = vld [vmem:[#allocation11 + $0x48] sm:$0xff]
    %v458 = vld [vmem:[#allocation11 + $0x50] sm:$0xff]
    %v459 = vld [vmem:[#allocation11 + $0x58] sm:$0xff]
    %v460 = vld [vmem:[#allocation11 + $0x60] sm:$0xff]
    %v461 = vld [vmem:[#allocation11 + $0x68] sm:$0xff]
    %v462 = vld [vmem:[#allocation11 + $0x70] sm:$0xff]
    %v463 = vld [vmem:[#allocation11 + $0x78] sm:$0xff]
    %v464 = vld [vmem:[#allocation6] sm:$0xff]
    %v465 = vld [vmem:[#allocation2] sm:$0xff]
    %466 = vmatprep.subr.mxu0 0.0
    %467 = vmatpush1.msra.mxu0 %v448
    %468 = vmatprep.subr.mxu0 0.0
    %469 = vmatpush1.msra.mxu0 %v449
    %470 = vmatprep.subr.mxu0 0.0
    %471 = vmatpush1.msra.mxu0 %v450
    %472 = vmatprep.subr.mxu0 0.0
    %473 = vmatpush1.msra.mxu0 %v451
    %474 = vmatprep.subr.mxu0 0.0
    %475 = vmatpush1.msra.mxu0 %v452
    %476 = vmatprep.subr.mxu0 0.0
    %477 = vmatpush1.msra.mxu0 %v453
    %478 = vmatprep.subr.mxu0 0.0
    %479 = vmatpush1.msra.mxu0 %v454
    %480 = vmatprep.subr.mxu0 0.0
    %481 = vmatpush1.msra.mxu0 %v455
    %482 = vmatprep.subr.mxu0 0.0
    %483 = vmatpush1.msra.mxu0 %v456
    %484 = vmatprep.subr.mxu0 0.0
    %485 = vmatpush1.msra.mxu0 %v457
    %486 = vmatprep.subr.mxu0 0.0
    %487 = vmatpush1.msra.mxu0 %v458
    %488 = vmatprep.subr.mxu0 0.0
    %489 = vmatpush1.msra.mxu0 %v459
    %490 = vmatprep.subr.mxu0 0.0
    %491 = vmatpush1.msra.mxu0 %v460
    %492 = vmatprep.subr.mxu0 0.0
    %493 = vmatpush1.msra.mxu0 %v461
    %494 = vmatprep.subr.mxu0 0.0
    %495 = vmatpush1.msra.mxu0 %v462
    %496 = vmatprep.subr.mxu0 0.0
    %497 = vmatpush1.msra.mxu0 %v463
    %498 = vmatprep.subr.mxu0 0.0
    %499 = vmatpush1.msra.mxu0 0.0
    %500 = vmatprep.subr.mxu0 0.0
    %501 = vmatpush1.msra.mxu0 0.0
    %502 = vmatprep.subr.mxu0 0.0
    %503 = vmatpush1.msra.mxu0 0.0
    %504 = vmatprep.subr.mxu0 0.0
    %505 = vmatpush1.msra.mxu0 0.0
    %506 = vmatprep.subr.mxu0 0.0
    %507 = vmatpush1.msra.mxu0 0.0
    %508 = vmatprep.subr.mxu0 0.0
    %509 = vmatpush1.msra.mxu0 0.0
    %510 = vmatprep.subr.mxu0 0.0
    %511 = vmatpush1.msra.mxu0 0.0
    %512 = vmatprep.subr.mxu0 0.0
    %513 = vmatpush1.msra.mxu0 0.0
    %514 = vmatprep.subr.mxu0 0.0
    %515 = vmatpush1.msra.mxu0 0.0
    %516 = vmatprep.subr.mxu0 0.0
    %517 = vmatpush1.msra.mxu0 0.0
    %518 = vmatprep.subr.mxu0 0.0
    %519 = vmatpush1.msra.mxu0 0.0
    %520 = vmatprep.subr.mxu0 0.0
    %521 = vmatpush1.msra.mxu0 0.0
    %522 = vmatprep.subr.mxu0 0.0
    %523 = vmatpush1.msra.mxu0 0.0
    %524 = vmatprep.subr.mxu0 0.0
    %525 = vmatpush1.msra.mxu0 0.0
    %526 = vmatprep.subr.mxu0 0.0
    %527 = vmatpush1.msra.mxu0 0.0
    %528 = vmatprep.subr.mxu0 0.0
    %529 = vmatpush1.msra.mxu0 0.0
    %530 = vmatprep.mubr.f32.mxu0 0.0
    %531 = vmatmul.mubr.f32.gmra.mrb[0].mxu0 %v464
    %v532 = vpop.f32.mrb[0].mxu0
    %v533 = vadd.f32 0.0, %v532
    %v534 = vpop.f32.mrb[0].mxu0
    %535 = vdwg.mxu0
    %v536 = vadd.f32 %v465, %v533
    %v537 = vtanh.pop %v536
    %s538 = scalar_lea.vmem [#allocation2], 8
    %v539 = vld [vmem:[%s538] sm:$0xff]
    %540 = vmatprep.subr.mxu0 0.0
    %541 = vmatpush1.msra.mxu0 %v448
    %542 = vmatprep.subr.mxu0 0.0
    %543 = vmatpush1.msra.mxu0 %v449
    %544 = vmatprep.subr.mxu0 0.0
    %545 = vmatpush1.msra.mxu0 %v450
    %546 = vmatprep.subr.mxu0 0.0
    %547 = vmatpush1.msra.mxu0 %v451
    %548 = vmatprep.subr.mxu0 0.0
    %549 = vmatpush1.msra.mxu0 %v452
    %550 = vmatprep.subr.mxu0 0.0
    %551 = vmatpush1.msra.mxu0 %v453
    %552 = vmatprep.subr.mxu0 0.0
    %553 = vmatpush1.msra.mxu0 %v454
    %554 = vmatprep.subr.mxu0 0.0
    %555 = vmatpush1.msra.mxu0 %v455
    %556 = vmatprep.subr.mxu0 0.0
    %557 = vmatpush1.msra.mxu0 %v456
    %558 = vmatprep.subr.mxu0 0.0
    %559 = vmatpush1.msra.mxu0 %v457
    %560 = vmatprep.subr.mxu0 0.0
    %561 = vmatpush1.msra.mxu0 %v458
    %562 = vmatprep.subr.mxu0 0.0
    %563 = vmatpush1.msra.mxu0 %v459
    %564 = vmatprep.subr.mxu0 0.0
    %565 = vmatpush1.msra.mxu0 %v460
    %566 = vmatprep.subr.mxu0 0.0
    %567 = vmatpush1.msra.mxu0 %v461
    %568 = vmatprep.subr.mxu0 0.0
    %569 = vmatpush1.msra.mxu0 %v462
    %570 = vmatprep.subr.mxu0 0.0
    %571 = vmatpush1.msra.mxu0 %v463
    %572 = vmatprep.subr.mxu0 0.0
    %573 = vmatpush1.msra.mxu0 0.0
    %574 = vmatprep.subr.mxu0 0.0
    %575 = vmatpush1.msra.mxu0 0.0
    %576 = vmatprep.subr.mxu0 0.0
    %577 = vmatpush1.msra.mxu0 0.0
    %578 = vmatprep.subr.mxu0 0.0
    %579 = vmatpush1.msra.mxu0 0.0
    %580 = vmatprep.subr.mxu0 0.0
    %581 = vmatpush1.msra.mxu0 0.0
    %582 = vmatprep.subr.mxu0 0.0
    %583 = vmatpush1.msra.mxu0 0.0
    %584 = vmatprep.subr.mxu0 0.0
    %585 = vmatpush1.msra.mxu0 0.0
    %586 = vmatprep.subr.mxu0 0.0
    %587 = vmatpush1.msra.mxu0 0.0
    %588 = vmatprep.subr.mxu0 0.0
    %589 = vmatpush1.msra.mxu0 0.0
    %590 = vmatprep.subr.mxu0 0.0
    %591 = vmatpush1.msra.mxu0 0.0
    %592 = vmatprep.subr.mxu0 0.0
    %593 = vmatpush1.msra.mxu0 0.0
    %594 = vmatprep.subr.mxu0 0.0
    %595 = vmatpush1.msra.mxu0 0.0
    %596 = vmatprep.subr.mxu0 0.0
    %597 = vmatpush1.msra.mxu0 0.0
    %598 = vmatprep.subr.mxu0 0.0
    %599 = vmatpush1.msra.mxu0 0.0
    %600 = vmatprep.subr.mxu0 0.0
    %601 = vmatpush1.msra.mxu0 0.0
    %602 = vmatprep.subr.mxu0 0.0
    %603 = vmatpush1.msra.mxu0 0.0
    %604 = vmatprep.mubr.f32.mxu0 0.0
    %605 = vmatmul.mubr.f32.gmra.mrb[0].mxu0 %v537
    %v606 = vpop.f32.mrb[0].mxu0
    %v607 = vadd.f32 0.0, %v606
    %v608 = vpop.f32.mrb[0].mxu0
    %609 = vdwg.mxu0
    %v610 = vadd.f32 %v539, %v607
    %v611 = vtanh.pop %v610
    %s612 = scalar_lea.vmem [#allocation2], 16
    %v613 = vld [vmem:[%s612] sm:$0xff]
    %614 = vmatprep.subr.mxu0 0.0
    %615 = vmatpush1.msra.mxu0 %v448
    %616 = vmatprep.subr.mxu0 0.0
    %617 = vmatpush1.msra.mxu0 %v449
    %618 = vmatprep.subr.mxu0 0.0
    %619 = vmatpush1.msra.mxu0 %v450
    %620 = vmatprep.subr.mxu0 0.0
    %621 = vmatpush1.msra.mxu0 %v451
    %622 = vmatprep.subr.mxu0 0.0
    %623 = vmatpush1.msra.mxu0 %v452
    %624 = vmatprep.subr.mxu0 0.0
    %625 = vmatpush1.msra.mxu0 %v453
    %626 = vmatprep.subr.mxu0 0.0
    %627 = vmatpush1.msra.mxu0 %v454
    %628 = vmatprep.subr.mxu0 0.0
    %629 = vmatpush1.msra.mxu0 %v455
    %630 = vmatprep.subr.mxu0 0.0
    %631 = vmatpush1.msra.mxu0 %v456
    %632 = vmatprep.subr.mxu0 0.0
    %633 = vmatpush1.msra.mxu0 %v457
    %634 = vmatprep.subr.mxu0 0.0
    %635 = vmatpush1.msra.mxu0 %v458
    %636 = vmatprep.subr.mxu0 0.0
    %637 = vmatpush1.msra.mxu0 %v459
    %638 = vmatprep.subr.mxu0 0.0
    %639 = vmatpush1.msra.mxu0 %v460
    %640 = vmatprep.subr.mxu0 0.0
    %641 = vmatpush1.msra.mxu0 %v461
    %642 = vmatprep.subr.mxu0 0.0
    %643 = vmatpush1.msra.mxu0 %v462
    %644 = vmatprep.subr.mxu0 0.0
    %645 = vmatpush1.msra.mxu0 %v463
    %646 = vmatprep.subr.mxu0 0.0
    %647 = vmatpush1.msra.mxu0 0.0
    %648 = vmatprep.subr.mxu0 0.0
    %649 = vmatpush1.msra.mxu0 0.0
    %650 = vmatprep.subr.mxu0 0.0
    %651 = vmatpush1.msra.mxu0 0.0
    %652 = vmatprep.subr.mxu0 0.0
    %653 = vmatpush1.msra.mxu0 0.0
    %654 = vmatprep.subr.mxu0 0.0
    %655 = vmatpush1.msra.mxu0 0.0
    %656 = vmatprep.subr.mxu0 0.0
    %657 = vmatpush1.msra.mxu0 0.0
    %658 = vmatprep.subr.mxu0 0.0
    %659 = vmatpush1.msra.mxu0 0.0
    %660 = vmatprep.subr.mxu0 0.0
    %661 = vmatpush1.msra.mxu0 0.0
    %662 = vmatprep.subr.mxu0 0.0
    %663 = vmatpush1.msra.mxu0 0.0
    %664 = vmatprep.subr.mxu0 0.0
    %665 = vmatpush1.msra.mxu0 0.0
    %666 = vmatprep.subr.mxu0 0.0
    %667 = vmatpush1.msra.mxu0 0.0
    %668 = vmatprep.subr.mxu0 0.0
    %669 = vmatpush1.msra.mxu0 0.0
    %670 = vmatprep.subr.mxu0 0.0
    %671 = vmatpush1.msra.mxu0 0.0
    %672 = vmatprep.subr.mxu0 0.0
    %673 = vmatpush1.msra.mxu0 0.0
    %674 = vmatprep.subr.mxu0 0.0
    %675 = vmatpush1.msra.mxu0 0.0
    %676 = vmatprep.subr.mxu0 0.0
    %677 = vmatpush1.msra.mxu0 0.0
    %678 = vmatprep.mubr.f32.mxu0 0.0
    %679 = vmatmul.mubr.f32.gmra.mrb[0].mxu0 %v611
    %v680 = vpop.f32.mrb[0].mxu0
    %v681 = vadd.f32 0.0, %v680
    %v682 = vpop.f32.mrb[0].mxu0
    %683 = vdwg.mxu0
    %v684 = vadd.f32 %v613, %v681
    %v685 = vtanh.pop %v684
    %s686 = scalar_lea.vmem [#allocation2], 24
    %v687 = vld [vmem:[%s686] sm:$0xff]
    %688 = vmatprep.subr.mxu0 0.0
    %689 = vmatpush1.msra.mxu0 %v448
    %690 = vmatprep.subr.mxu0 0.0
    %691 = vmatpush1.msra.mxu0 %v449
    %692 = vmatprep.subr.mxu0 0.0
    %693 = vmatpush1.msra.mxu0 %v450
    %694 = vmatprep.subr.mxu0 0.0
    %695 = vmatpush1.msra.mxu0 %v451
    %696 = vmatprep.subr.mxu0 0.0
    %697 = vmatpush1.msra.mxu0 %v452
    %698 = vmatprep.subr.mxu0 0.0
    %699 = vmatpush1.msra.mxu0 %v453
    %700 = vmatprep.subr.mxu0 0.0
    %701 = vmatpush1.msra.mxu0 %v454
    %702 = vmatprep.subr.mxu0 0.0
    %703 = vmatpush1.msra.mxu0 %v455
    %704 = vmatprep.subr.mxu0 0.0
    %705 = vmatpush1.msra.mxu0 %v456
    %706 = vmatprep.subr.mxu0 0.0
    %707 = vmatpush1.msra.mxu0 %v457
    %708 = vmatprep.subr.mxu0 0.0
    %709 = vmatpush1.msra.mxu0 %v458
    %710 = vmatprep.subr.mxu0 0.0
    %711 = vmatpush1.msra.mxu0 %v459
    %712 = vmatprep.subr.mxu0 0.0
    %713 = vmatpush1.msra.mxu0 %v460
    %714 = vmatprep.subr.mxu0 0.0
    %715 = vmatpush1.msra.mxu0 %v461
    %716 = vmatprep.subr.mxu0 0.0
    %717 = vmatpush1.msra.mxu0 %v462
    %718 = vmatprep.subr.mxu0 0.0
    %719 = vmatpush1.msra.mxu0 %v463
    %720 = vmatprep.subr.mxu0 0.0
    %721 = vmatpush1.msra.mxu0 0.0
    %722 = vmatprep.subr.mxu0 0.0
    %723 = vmatpush1.msra.mxu0 0.0
    %724 = vmatprep.subr.mxu0 0.0
    %725 = vmatpush1.msra.mxu0 0.0
    %726 = vmatprep.subr.mxu0 0.0
    %727 = vmatpush1.msra.mxu0 0.0
    %728 = vmatprep.subr.mxu0 0.0
    %729 = vmatpush1.msra.mxu0 0.0
    %730 = vmatprep.subr.mxu0 0.0
    %731 = vmatpush1.msra.mxu0 0.0
    %732 = vmatprep.subr.mxu0 0.0
    %733 = vmatpush1.msra.mxu0 0.0
    %734 = vmatprep.subr.mxu0 0.0
    %735 = vmatpush1.msra.mxu0 0.0
    %736 = vmatprep.subr.mxu0 0.0
    %737 = vmatpush1.msra.mxu0 0.0
    %738 = vmatprep.subr.mxu0 0.0
    %739 = vmatpush1.msra.mxu0 0.0
    %740 = vmatprep.subr.mxu0 0.0
    %741 = vmatpush1.msra.mxu0 0.0
    %742 = vmatprep.subr.mxu0 0.0
    %743 = vmatpush1.msra.mxu0 0.0
    %744 = vmatprep.subr.mxu0 0.0
    %745 = vmatpush1.msra.mxu0 0.0
    %746 = vmatprep.subr.mxu0 0.0
    %747 = vmatpush1.msra.mxu0 0.0
    %748 = vmatprep.subr.mxu0 0.0
    %749 = vmatpush1.msra.mxu0 0.0
    %750 = vmatprep.subr.mxu0 0.0
    %751 = vmatpush1.msra.mxu0 0.0
    %752 = vmatprep.mubr.f32.mxu0 0.0
    %753 = vmatmul.mubr.f32.gmra.mrb[0].mxu0 %v685
    %v754 = vpop.f32.mrb[0].mxu0
    %v755 = vadd.f32 0.0, %v754
    %v756 = vpop.f32.mrb[0].mxu0
    %757 = vdwg.mxu0
    %v758 = vadd.f32 %v687, %v755
    %v759 = vtanh.pop %v758
    %s760 = scalar_lea.vmem [#allocation2], 32
    %v761 = vld [vmem:[%s760] sm:$0xff]
    %762 = vmatprep.subr.mxu0 0.0
    %763 = vmatpush1.msra.mxu0 %v448
    %764 = vmatprep.subr.mxu0 0.0
    %765 = vmatpush1.msra.mxu0 %v449
    %766 = vmatprep.subr.mxu0 0.0
    %767 = vmatpush1.msra.mxu0 %v450
    %768 = vmatprep.subr.mxu0 0.0
    %769 = vmatpush1.msra.mxu0 %v451
    %770 = vmatprep.subr.mxu0 0.0
    %771 = vmatpush1.msra.mxu0 %v452
    %772 = vmatprep.subr.mxu0 0.0
    %773 = vmatpush1.msra.mxu0 %v453
    %774 = vmatprep.subr.mxu0 0.0
    %775 = vmatpush1.msra.mxu0 %v454
    %776 = vmatprep.subr.mxu0 0.0
    %777 = vmatpush1.msra.mxu0 %v455
    %778 = vmatprep.subr.mxu0 0.0
    %779 = vmatpush1.msra.mxu0 %v456
    %780 = vmatprep.subr.mxu0 0.0
    %781 = vmatpush1.msra.mxu0 %v457
    %782 = vmatprep.subr.mxu0 0.0
    %783 = vmatpush1.msra.mxu0 %v458
    %784 = vmatprep.subr.mxu0 0.0
    %785 = vmatpush1.msra.mxu0 %v459
    %786 = vmatprep.subr.mxu0 0.0
    %787 = vmatpush1.msra.mxu0 %v460
    %788 = vmatprep.subr.mxu0 0.0
    %789 = vmatpush1.msra.mxu0 %v461
    %790 = vmatprep.subr.mxu0 0.0
    %791 = vmatpush1.msra.mxu0 %v462
    %792 = vmatprep.subr.mxu0 0.0
    %793 = vmatpush1.msra.mxu0 %v463
    %794 = vmatprep.subr.mxu0 0.0
    %795 = vmatpush1.msra.mxu0 0.0
    %796 = vmatprep.subr.mxu0 0.0
    %797 = vmatpush1.msra.mxu0 0.0
    %798 = vmatprep.subr.mxu0 0.0
    %799 = vmatpush1.msra.mxu0 0.0
    %800 = vmatprep.subr.mxu0 0.0
    %801 = vmatpush1.msra.mxu0 0.0
    %802 = vmatprep.subr.mxu0 0.0
    %803 = vmatpush1.msra.mxu0 0.0
    %804 = vmatprep.subr.mxu0 0.0
    %805 = vmatpush1.msra.mxu0 0.0
    %806 = vmatprep.subr.mxu0 0.0
    %807 = vmatpush1.msra.mxu0 0.0
    %808 = vmatprep.subr.mxu0 0.0
    %809 = vmatpush1.msra.mxu0 0.0
    %810 = vmatprep.subr.mxu0 0.0
    %811 = vmatpush1.msra.mxu0 0.0
    %812 = vmatprep.subr.mxu0 0.0
    %813 = vmatpush1.msra.mxu0 0.0
    %814 = vmatprep.subr.mxu0 0.0
    %815 = vmatpush1.msra.mxu0 0.0
    %816 = vmatprep.subr.mxu0 0.0
    %817 = vmatpush1.msra.mxu0 0.0
    %818 = vmatprep.subr.mxu0 0.0
    %819 = vmatpush1.msra.mxu0 0.0
    %820 = vmatprep.subr.mxu0 0.0
    %821 = vmatpush1.msra.mxu0 0.0
    %822 = vmatprep.subr.mxu0 0.0
    %823 = vmatpush1.msra.mxu0 0.0
    %824 = vmatprep.subr.mxu0 0.0
    %825 = vmatpush1.msra.mxu0 0.0
    %826 = vmatprep.mubr.f32.mxu0 0.0
    %827 = vmatmul.mubr.f32.gmra.mrb[0].mxu0 %v759
    %v828 = vpop.f32.mrb[0].mxu0
    %v829 = vadd.f32 0.0, %v828
    %v830 = vpop.f32.mrb[0].mxu0
    %831 = vdwg.mxu0
    %v832 = vadd.f32 %v761, %v829
    %v833 = vtanh.pop %v832
    %s834 = scalar_lea.vmem [#allocation2], 40
    %v835 = vld [vmem:[%s834] sm:$0xff]
    %836 = vmatprep.subr.mxu0 0.0
    %837 = vmatpush1.msra.mxu0 %v448
    %838 = vmatprep.subr.mxu0 0.0
    %839 = vmatpush1.msra.mxu0 %v449
    %840 = vmatprep.subr.mxu0 0.0
    %841 = vmatpush1.msra.mxu0 %v450
    %842 = vmatprep.subr.mxu0 0.0
    %843 = vmatpush1.msra.mxu0 %v451
    %844 = vmatprep.subr.mxu0 0.0
    %845 = vmatpush1.msra.mxu0 %v452
    %846 = vmatprep.subr.mxu0 0.0
    %847 = vmatpush1.msra.mxu0 %v453
    %848 = vmatprep.subr.mxu0 0.0
    %849 = vmatpush1.msra.mxu0 %v454
    %850 = vmatprep.subr.mxu0 0.0
    %851 = vmatpush1.msra.mxu0 %v455
    %852 = vmatprep.subr.mxu0 0.0
    %853 = vmatpush1.msra.mxu0 %v456
    %854 = vmatprep.subr.mxu0 0.0
    %855 = vmatpush1.msra.mxu0 %v457
    %856 = vmatprep.subr.mxu0 0.0
    %857 = vmatpush1.msra.mxu0 %v458
    %858 = vmatprep.subr.mxu0 0.0
    %859 = vmatpush1.msra.mxu0 %v459
    %860 = vmatprep.subr.mxu0 0.0
    %861 = vmatpush1.msra.mxu0 %v460
    %862 = vmatprep.subr.mxu0 0.0
    %863 = vmatpush1.msra.mxu0 %v461
    %864 = vmatprep.subr.mxu0 0.0
    %865 = vmatpush1.msra.mxu0 %v462
    %866 = vmatprep.subr.mxu0 0.0
    %867 = vmatpush1.msra.mxu0 %v463
    %868 = vmatprep.subr.mxu0 0.0
    %869 = vmatpush1.msra.mxu0 0.0
    %870 = vmatprep.subr.mxu0 0.0
    %871 = vmatpush1.msra.mxu0 0.0
    %872 = vmatprep.subr.mxu0 0.0
    %873 = vmatpush1.msra.mxu0 0.0
    %874 = vmatprep.subr.mxu0 0.0
    %875 = vmatpush1.msra.mxu0 0.0
    %876 = vmatprep.subr.mxu0 0.0
    %877 = vmatpush1.msra.mxu0 0.0
    %878 = vmatprep.subr.mxu0 0.0
    %879 = vmatpush1.msra.mxu0 0.0
    %880 = vmatprep.subr.mxu0 0.0
    %881 = vmatpush1.msra.mxu0 0.0
    %882 = vmatprep.subr.mxu0 0.0
    %883 = vmatpush1.msra.mxu0 0.0
    %884 = vmatprep.subr.mxu0 0.0
    %885 = vmatpush1.msra.mxu0 0.0
    %886 = vmatprep.subr.mxu0 0.0
    %887 = vmatpush1.msra.mxu0 0.0
    %888 = vmatprep.subr.mxu0 0.0
    %889 = vmatpush1.msra.mxu0 0.0
    %890 = vmatprep.subr.mxu0 0.0
    %891 = vmatpush1.msra.mxu0 0.0
    %892 = vmatprep.subr.mxu0 0.0
    %893 = vmatpush1.msra.mxu0 0.0
    %894 = vmatprep.subr.mxu0 0.0
    %895 = vmatpush1.msra.mxu0 0.0
    %896 = vmatprep.subr.mxu0 0.0
    %897 = vmatpush1.msra.mxu0 0.0
    %898 = vmatprep.subr.mxu0 0.0
    %899 = vmatpush1.msra.mxu0 0.0
    %900 = vmatprep.mubr.f32.mxu0 0.0
    %901 = vmatmul.mubr.f32.gmra.mrb[0].mxu0 %v833
    %v902 = vpop.f32.mrb[0].mxu0
    %v903 = vadd.f32 0.0, %v902
    %v904 = vpop.f32.mrb[0].mxu0
    %905 = vdwg.mxu0
    %v906 = vadd.f32 %v835, %v903
    %v907 = vtanh.pop %v906
    %s908 = scalar_lea.vmem [#allocation2], 48
    %v909 = vld [vmem:[%s908] sm:$0xff]
    %910 = vmatprep.subr.mxu0 0.0
    %911 = vmatpush1.msra.mxu0 %v448
    %912 = vmatprep.subr.mxu0 0.0
    %913 = vmatpush1.msra.mxu0 %v449
    %914 = vmatprep.subr.mxu0 0.0
    %915 = vmatpush1.msra.mxu0 %v450
    %916 = vmatprep.subr.mxu0 0.0
    %917 = vmatpush1.msra.mxu0 %v451
    %918 = vmatprep.subr.mxu0 0.0
    %919 = vmatpush1.msra.mxu0 %v452
    %920 = vmatprep.subr.mxu0 0.0
    %921 = vmatpush1.msra.mxu0 %v453
    %922 = vmatprep.subr.mxu0 0.0
    %923 = vmatpush1.msra.mxu0 %v454
    %924 = vmatprep.subr.mxu0 0.0
    %925 = vmatpush1.msra.mxu0 %v455
    %926 = vmatprep.subr.mxu0 0.0
    %927 = vmatpush1.msra.mxu0 %v456
    %928 = vmatprep.subr.mxu0 0.0
    %929 = vmatpush1.msra.mxu0 %v457
    %930 = vmatprep.subr.mxu0 0.0
    %931 = vmatpush1.msra.mxu0 %v458
    %932 = vmatprep.subr.mxu0 0.0
    %933 = vmatpush1.msra.mxu0 %v459
    %934 = vmatprep.subr.mxu0 0.0
    %935 = vmatpush1.msra.mxu0 %v460
    %936 = vmatprep.subr.mxu0 0.0
    %937 = vmatpush1.msra.mxu0 %v461
    %938 = vmatprep.subr.mxu0 0.0
    %939 = vmatpush1.msra.mxu0 %v462
    %940 = vmatprep.subr.mxu0 0.0
    %941 = vmatpush1.msra.mxu0 %v463
    %942 = vmatprep.subr.mxu0 0.0
    %943 = vmatpush1.msra.mxu0 0.0
    %944 = vmatprep.subr.mxu0 0.0
    %945 = vmatpush1.msra.mxu0 0.0
    %946 = vmatprep.subr.mxu0 0.0
    %947 = vmatpush1.msra.mxu0 0.0
    %948 = vmatprep.subr.mxu0 0.0
    %949 = vmatpush1.msra.mxu0 0.0
    %950 = vmatprep.subr.mxu0 0.0
    %951 = vmatpush1.msra.mxu0 0.0
    %952 = vmatprep.subr.mxu0 0.0
    %953 = vmatpush1.msra.mxu0 0.0
    %954 = vmatprep.subr.mxu0 0.0
    %955 = vmatpush1.msra.mxu0 0.0
    %956 = vmatprep.subr.mxu0 0.0
    %957 = vmatpush1.msra.mxu0 0.0
    %958 = vmatprep.subr.mxu0 0.0
    %959 = vmatpush1.msra.mxu0 0.0
    %960 = vmatprep.subr.mxu0 0.0
    %961 = vmatpush1.msra.mxu0 0.0
    %962 = vmatprep.subr.mxu0 0.0
    %963 = vmatpush1.msra.mxu0 0.0
    %964 = vmatprep.subr.mxu0 0.0
    %965 = vmatpush1.msra.mxu0 0.0
    %966 = vmatprep.subr.mxu0 0.0
    %967 = vmatpush1.msra.mxu0 0.0
    %968 = vmatprep.subr.mxu0 0.0
    %969 = vmatpush1.msra.mxu0 0.0
    %970 = vmatprep.subr.mxu0 0.0
    %971 = vmatpush1.msra.mxu0 0.0
    %972 = vmatprep.subr.mxu0 0.0
    %973 = vmatpush1.msra.mxu0 0.0
    %974 = vmatprep.mubr.f32.mxu0 0.0
    %975 = vmatmul.mubr.f32.gmra.mrb[0].mxu0 %v907
    %v976 = vpop.f32.mrb[0].mxu0
    %v977 = vadd.f32 0.0, %v976
    %v978 = vpop.f32.mrb[0].mxu0
    %979 = vdwg.mxu0
    %v980 = vadd.f32 %v909, %v977
    %v981 = vtanh.pop %v980
    %s982 = scalar_lea.vmem [#allocation2], 56
    %v983 = vld [vmem:[%s982] sm:$0xff]
    %984 = vmatprep.subr.mxu0 0.0
    %985 = vmatpush1.msra.mxu0 %v448
    %986 = vmatprep.subr.mxu0 0.0
    %987 = vmatpush1.msra.mxu0 %v449
    %988 = vmatprep.subr.mxu0 0.0
    %989 = vmatpush1.msra.mxu0 %v450
    %990 = vmatprep.subr.mxu0 0.0
    %991 = vmatpush1.msra.mxu0 %v451
    %992 = vmatprep.subr.mxu0 0.0
    %993 = vmatpush1.msra.mxu0 %v452
    %994 = vmatprep.subr.mxu0 0.0
    %995 = vmatpush1.msra.mxu0 %v453
    %996 = vmatprep.subr.mxu0 0.0
    %997 = vmatpush1.msra.mxu0 %v454
    %998 = vmatprep.subr.mxu0 0.0
    %999 = vmatpush1.msra.mxu0 %v455
    %1000 = vmatprep.subr.mxu0 0.0
    %1001 = vmatpush1.msra.mxu0 %v456
    %1002 = vmatprep.subr.mxu0 0.0
    %1003 = vmatpush1.msra.mxu0 %v457
    %1004 = vmatprep.subr.mxu0 0.0
    %1005 = vmatpush1.msra.mxu0 %v458
    %1006 = vmatprep.subr.mxu0 0.0
    %1007 = vmatpush1.msra.mxu0 %v459
    %1008 = vmatprep.subr.mxu0 0.0
    %1009 = vmatpush1.msra.mxu0 %v460
    %1010 = vmatprep.subr.mxu0 0.0
    %1011 = vmatpush1.msra.mxu0 %v461
    %1012 = vmatprep.subr.mxu0 0.0
    %1013 = vmatpush1.msra.mxu0 %v462
    %1014 = vmatprep.subr.mxu0 0.0
    %1015 = vmatpush1.msra.mxu0 %v463
    %1016 = vmatprep.subr.mxu0 0.0
    %1017 = vmatpush1.msra.mxu0 0.0
    %1018 = vmatprep.subr.mxu0 0.0
    %1019 = vmatpush1.msra.mxu0 0.0
    %1020 = vmatprep.subr.mxu0 0.0
    %1021 = vmatpush1.msra.mxu0 0.0
    %1022 = vmatprep.subr.mxu0 0.0
    %1023 = vmatpush1.msra.mxu0 0.0
    %1024 = vmatprep.subr.mxu0 0.0
    %1025 = vmatpush1.msra.mxu0 0.0
    %1026 = vmatprep.subr.mxu0 0.0
    %1027 = vmatpush1.msra.mxu0 0.0
    %1028 = vmatprep.subr.mxu0 0.0
    %1029 = vmatpush1.msra.mxu0 0.0
    %1030 = vmatprep.subr.mxu0 0.0
    %1031 = vmatpush1.msra.mxu0 0.0
    %1032 = vmatprep.subr.mxu0 0.0
    %1033 = vmatpush1.msra.mxu0 0.0
    %1034 = vmatprep.subr.mxu0 0.0
    %1035 = vmatpush1.msra.mxu0 0.0
    %1036 = vmatprep.subr.mxu0 0.0
    %1037 = vmatpush1.msra.mxu0 0.0
    %1038 = vmatprep.subr.mxu0 0.0
    %1039 = vmatpush1.msra.mxu0 0.0
    %1040 = vmatprep.subr.mxu0 0.0
    %1041 = vmatpush1.msra.mxu0 0.0
    %1042 = vmatprep.subr.mxu0 0.0
    %1043 = vmatpush1.msra.mxu0 0.0
    %1044 = vmatprep.subr.mxu0 0.0
    %1045 = vmatpush1.msra.mxu0 0.0
    %1046 = vmatprep.subr.mxu0 0.0
    %1047 = vmatpush1.msra.mxu0 0.0
    %1048 = vmatprep.mubr.f32.mxu0 0.0
    %1049 = vmatmul.mubr.f32.gmra.mrb[0].mxu0 %v981
    %v1050 = vpop.f32.mrb[0].mxu0
    %v1051 = vadd.f32 0.0, %v1050
    %v1052 = vpop.f32.mrb[0].mxu0
    %1053 = vdwg.mxu0
    %v1054 = vadd.f32 %v983, %v1051
    %v1055 = vtanh.pop %v1054
    %v1056 = vld [vmem:[#allocation12] sm:$0xff]
    %v1057 = vld [vmem:[#allocation12 + $0x8] sm:$0xff]
    %v1058 = vld [vmem:[#allocation12 + $0x10] sm:$0xff]
    %v1059 = vld [vmem:[#allocation12 + $0x18] sm:$0xff]
    %v1060 = vld [vmem:[#allocation12 + $0x20] sm:$0xff]
    %v1061 = vld [vmem:[#allocation12 + $0x28] sm:$0xff]
    %v1062 = vld [vmem:[#allocation12 + $0x30] sm:$0xff]
    %v1063 = vld [vmem:[#allocation12 + $0x38] sm:$0xff]
    %v1064 = vld [vmem:[#allocation12 + $0x40] sm:$0xff]
    %v1065 = vld [vmem:[#allocation12 + $0x48] sm:$0xff]
    %v1066 = vld [vmem:[#allocation12 + $0x50] sm:$0xff]
    %v1067 = vld [vmem:[#allocation12 + $0x58] sm:$0xff]
    %v1068 = vld [vmem:[#allocation12 + $0x60] sm:$0xff]
    %v1069 = vld [vmem:[#allocation12 + $0x68] sm:$0xff]
    %v1070 = vld [vmem:[#allocation12 + $0x70] sm:$0xff]
    %v1071 = vld [vmem:[#allocation12 + $0x78] sm:$0xff]
    %v1072 = vld [vmem:[%s7] sm:$0x1]
    %v1074 = vlaneseq
    %v1075 = vshrl.u32 %v1074, 7
    %v1076 = vsub.s32 0, %v1075
    %v1077 = vrot.slane %v1072, %v1076
    %1079 = vmatprep.subr.mxu0 0.0
    %1080 = vmatpush1.msra.mxu0 %v1056
    %1081 = vmatprep.subr.mxu0 0.0
    %1082 = vmatpush1.msra.mxu0 %v1057
    %1083 = vmatprep.subr.mxu0 0.0
    %1084 = vmatpush1.msra.mxu0 %v1058
    %1085 = vmatprep.subr.mxu0 0.0
    %1086 = vmatpush1.msra.mxu0 %v1059
    %1087 = vmatprep.subr.mxu0 0.0
    %1088 = vmatpush1.msra.mxu0 %v1060
    %1089 = vmatprep.subr.mxu0 0.0
    %1090 = vmatpush1.msra.mxu0 %v1061
    %1091 = vmatprep.subr.mxu0 0.0
    %1092 = vmatpush1.msra.mxu0 %v1062
    %1093 = vmatprep.subr.mxu0 0.0
    %1094 = vmatpush1.msra.mxu0 %v1063
    %1095 = vmatprep.subr.mxu0 0.0
    %1096 = vmatpush1.msra.mxu0 %v1064
    %1097 = vmatprep.subr.mxu0 0.0
    %1098 = vmatpush1.msra.mxu0 %v1065
    %1099 = vmatprep.subr.mxu0 0.0
    %1100 = vmatpush1.msra.mxu0 %v1066
    %1101 = vmatprep.subr.mxu0 0.0
    %1102 = vmatpush1.msra.mxu0 %v1067
    %1103 = vmatprep.subr.mxu0 0.0
    %1104 = vmatpush1.msra.mxu0 %v1068
    %1105 = vmatprep.subr.mxu0 0.0
    %1106 = vmatpush1.msra.mxu0 %v1069
    %1107 = vmatprep.subr.mxu0 0.0
    %1108 = vmatpush1.msra.mxu0 %v1070
    %1109 = vmatprep.subr.mxu0 0.0
    %1110 = vmatpush1.msra.mxu0 %v1071
    %1111 = vmatprep.subr.mxu0 0.0
    %1112 = vmatpush1.msra.mxu0 0.0
    %1113 = vmatprep.subr.mxu0 0.0
    %1114 = vmatpush1.msra.mxu0 0.0
    %1115 = vmatprep.subr.mxu0 0.0
    %1116 = vmatpush1.msra.mxu0 0.0
    %1117 = vmatprep.subr.mxu0 0.0
    %1118 = vmatpush1.msra.mxu0 0.0
    %1119 = vmatprep.subr.mxu0 0.0
    %1120 = vmatpush1.msra.mxu0 0.0
    %1121 = vmatprep.subr.mxu0 0.0
    %1122 = vmatpush1.msra.mxu0 0.0
    %1123 = vmatprep.subr.mxu0 0.0
    %1124 = vmatpush1.msra.mxu0 0.0
    %1125 = vmatprep.subr.mxu0 0.0
    %1126 = vmatpush1.msra.mxu0 0.0
    %1127 = vmatprep.subr.mxu0 0.0
    %1128 = vmatpush1.msra.mxu0 0.0
    %1129 = vmatprep.subr.mxu0 0.0
    %1130 = vmatpush1.msra.mxu0 0.0
    %1131 = vmatprep.subr.mxu0 0.0
    %1132 = vmatpush1.msra.mxu0 0.0
    %1133 = vmatprep.subr.mxu0 0.0
    %1134 = vmatpush1.msra.mxu0 0.0
    %1135 = vmatprep.subr.mxu0 0.0
    %1136 = vmatpush1.msra.mxu0 0.0
    %1137 = vmatprep.subr.mxu0 0.0
    %1138 = vmatpush1.msra.mxu0 0.0
    %1139 = vmatprep.subr.mxu0 0.0
    %1140 = vmatpush1.msra.mxu0 0.0
    %1141 = vmatprep.subr.mxu0 0.0
    %1142 = vmatpush1.msra.mxu0 0.0
    %1143 = vmatprep.mubr.f32.mxu0 0.0
    %1144 = vmatmul.mubr.f32.gmra.mrb[0].mxu0 %v1055
    %v1145 = vpop.f32.mrb[0].mxu0
    %v1146 = vadd.f32 %v1077, %v1145
    %v1147 = vpop.f32.mrb[0].mxu0
    %1148 = vdwg.mxu0
    %1149 = vst [vmem:[#allocation14] sm:$0xff] %v1146
    // Predicated region
    $region58: #{tpu_custom_call.1} parent=1 // pred_check
      _
    $region59: #{tpu_custom_call.1} parent=1 // pred_check_branch
      %1151 = sbr.rel (0) target = $region61
    $region60: #{tpu_custom_call.1} parent=1 // pred_region
      %s1153 = ssub.s32 128, 128
      %1154 = vsyncadd [#allocation5], %s1153
      %s1156 = sshll.u32 [#allocation14], 4
      %s1157 = int_to_ptr.vmem [resolvable:$true] %s1156
      %1159 = dma.vmem_to_hbm [thread:$0]  %s1157, 128, %s8, [#allocation5]
    $region61: #{tpu_custom_call.1} parent=1 // pred_fallthru
      _
    // Predicated region
    $region62: #{tpu_custom_call.1} parent=1 // pred_check
      _
    $region63: #{tpu_custom_call.1} parent=1 // pred_check_branch
      %1161 = sbr.rel (0) target = $region65
    $region64: #{tpu_custom_call.1} parent=1 // pred_region
      %1162 = dma.done [#allocation5], 128
    $region65: #{tpu_custom_call.1} parent=1 // pred_fallthru
      _
    %1163 = vsyncpa [#allocation4], 1
    %1164 = vsyncpa [#allocation7], 1
    %1165 = vsyncpa [#allocation10], 1
    %1166 = vsyncpa [#allocation13], 1
    %1167 = vsyncpa [#allocation5], 1

</llo_original>
